<compile_context>
chip_gen: v7x
topology: tpu7x:2x2x1
jax: 0.10.0
libtpu: 0.0.40
codegen_flags: <defaults>
</compile_context>

<pallas_src>
import functools

import jax
import jax.numpy as jnp
from jax.experimental import pallas as pl
from jax.experimental.pallas import tpu as pltpu


# ---------------------------------------------------------------------------
# Fused model kernel (one batch element per parallel grid step, layers inner)
# ---------------------------------------------------------------------------
def _layer_norm(x, g, b):
    mu = jnp.mean(x, axis=-1, keepdims=True)
    var = jnp.mean((x - mu) ** 2, axis=-1, keepdims=True)
    return (x - mu) * jax.lax.rsqrt(var + 1e-5) * g + b


def _model_kernel(src_ref, mf_ref,
                  wqkv_ref, bqkv_ref, wo_ref, bo_ref,
                  ln1g_ref, ln1b_ref, w1_ref, b1_ref, w2_ref, b2_ref,
                  ln2g_ref, ln2b_ref,
                  wdec_ref, wcls_ref, bcls_ref,
                  logits_ref, fv_ref,
                  x_ref,
                  *, nhead, S, D):
    l = pl.program_id(1)
    dh = D // nhead
    scale = 1.0 / float(dh) ** 0.5

    # ---- load the residual stream into persistent VMEM state at layer 0 -----
    @pl.when(l == 0)
    def _():
        x_ref[...] = src_ref[...]

    x = x_ref[...]                                            # (S, D) f32

    # ---- additive causal mask built in-kernel (no (S,S) DMA per layer) ------
    row = jax.lax.broadcasted_iota(jnp.int32, (S, S), 0)
    col = jax.lax.broadcasted_iota(jnp.int32, (S, S), 1)
    causal = jnp.where(col > row, -1e9, 0.0).astype(jnp.float32)

    # ---- fused QKV projection (bf16 MXU, f32 accumulation) ------------------
    # weight columns are packed HEAD-MAJOR wrapper-side:
    #   per head h the 3*dh columns are [q_h | k_h | v_h]
    qkv = jnp.dot(x.astype(jnp.bfloat16), wqkv_ref[...],
                  preferred_element_type=jnp.float32) + bqkv_ref[...]   # (S, 3D)

    # head split: H head-major chunk slices + 3 q/k/v slices, stacked onto a
    # leading (major) head axis -> batched 3-D einsums, no per-head matmuls
    stk = jnp.stack(
        [qkv[:, h * 3 * dh:(h + 1) * 3 * dh] for h in range(nhead)], axis=0)  # (H,S,3dh)
    q = stk[:, :, 0:dh].astype(jnp.bfloat16)
    k = stk[:, :, dh:2 * dh].astype(jnp.bfloat16)
    v = stk[:, :, 2 * dh:3 * dh].astype(jnp.bfloat16)

    s = jnp.einsum('hqd,hkd->hqk', q, k,
                   preferred_element_type=jnp.float32) * scale          # (H,S,S) f32
    s = s + causal[None, :, :]
    m = jnp.max(s, axis=-1, keepdims=True)
    e = jnp.exp(s - m)
    p = e * pl.reciprocal(jnp.sum(e, axis=-1, keepdims=True), approx=True)

    ctx = jnp.einsum('hqk,hkd->hqd', p.astype(jnp.bfloat16), v,
                     preferred_element_type=jnp.float32)                # (H,S,dh) f32

    # merge heads back onto the lane axis, ONE D-deep output projection
    ctx_m = jnp.concatenate([ctx[h] for h in range(nhead)], axis=-1)    # (S, D)
    attn = jnp.dot(ctx_m.astype(jnp.bfloat16), wo_ref[...],
                   preferred_element_type=jnp.float32) + bo_ref[...]    # (S, D)

    h1 = _layer_norm(x + attn, ln1g_ref[...], ln1b_ref[...])

    ff = jnp.dot(h1.astype(jnp.bfloat16), w1_ref[...],
                 preferred_element_type=jnp.float32) + b1_ref[...]
    ff = jnp.maximum(ff, 0.0)
    ff = jnp.dot(ff.astype(jnp.bfloat16), w2_ref[...],
                 preferred_element_type=jnp.float32) + b2_ref[...]

    xo = _layer_norm(h1 + ff, ln2g_ref[...], ln2b_ref[...])
    x_ref[...] = xo

    # ---- head (last layer only): decoder linear + masked mean + classifier --
    # Decoder/classifier weights are zero-padded to 128 lanes wrapper-side, so
    # the outputs are lane-dense (no masked partial stores).
    @pl.when(l == pl.num_programs(1) - 1)
    def _():
        out = jnp.dot(xo.astype(jnp.bfloat16), wdec_ref[...],
                      preferred_element_type=jnp.float32)               # (S, Dp)
        # PyTorch: (output * mask_final).mean(dim=1) -> divide by S, not mask count
        fv = jnp.sum(out * mf_ref[...], axis=0, keepdims=True) * (1.0 / S)  # (1, Dp)
        fv_ref[...] = fv
        logits_ref[...] = (jnp.dot(fv.astype(jnp.bfloat16), wcls_ref[...],
                                   preferred_element_type=jnp.float32)
                           + bcls_ref[...])                             # (1, Cp)


# ---------------------------------------------------------------------------
# Glue: params, positional encoding, full forward
# ---------------------------------------------------------------------------
def fixed_positional_encoding(S, D):
    assert D % 2 == 0, "fixed sinusoidal PE assumes an even model dim"
    pos = jnp.arange(S, dtype=jnp.float32)[:, None]
    div = jnp.exp(jnp.arange(0, D, 2, dtype=jnp.float32) * (-jnp.log(10000.0) / D))
    pe = jnp.zeros((S, D), jnp.float32)
    pe = pe.at[:, 0::2].set(jnp.sin(pos * div))
    pe = pe.at[:, 1::2].set(jnp.cos(pos * div))
    return pe


def init_params(key, code_size, ninp, nlayers, nff, nclass=100):
    keys = jax.random.split(key, 3 + nlayers)

    def xavier(k, shape):
        fan_in, fan_out = shape[-2], shape[-1]
        bound = (6.0 / (fan_in + fan_out)) ** 0.5
        return jax.random.uniform(k, shape, jnp.float32, -bound, bound)

    # NOTE: PyTorch nn.Linear stores weight as (out, in) and applies x @ W.T;
    # synthetic weights are initialized directly in (in, out) layout here.
    params = {
        'embedding': xavier(keys[0], (code_size + 1, ninp)),
        'wdec': xavier(keys[1], (ninp, ninp)),
        'wcls': xavier(keys[2], (ninp, nclass)),
        'bcls': jnp.zeros((nclass,), jnp.float32),
        'layers': [],
    }
    for l in range(nlayers):
        lk = jax.random.split(keys[3 + l], 6)
        params['layers'].append({
            'wq': xavier(lk[0], (ninp, ninp)), 'bq': jnp.zeros((ninp,), jnp.float32),
            'wk': xavier(lk[1], (ninp, ninp)), 'bk': jnp.zeros((ninp,), jnp.float32),
            'wv': xavier(lk[2], (ninp, ninp)), 'bv': jnp.zeros((ninp,), jnp.float32),
            'wo': xavier(lk[3], (ninp, ninp)), 'bo': jnp.zeros((ninp,), jnp.float32),
            'w1': xavier(lk[4], (ninp, nff)),  'b1': jnp.zeros((nff,), jnp.float32),
            'w2': xavier(lk[5], (nff, ninp)),  'b2': jnp.zeros((ninp,), jnp.float32),
            'ln1_g': jnp.ones((ninp,), jnp.float32), 'ln1_b': jnp.zeros((ninp,), jnp.float32),
            'ln2_g': jnp.ones((ninp,), jnp.float32), 'ln2_b': jnp.zeros((ninp,), jnp.float32),
        })
    return params


def _round_up(x, m):
    return ((x + m - 1) // m) * m


def forward(params, batch, nhead):
    origin_visit = batch['origin_visit']                 # (B, S, C) int32
    mask_code = batch['origin_mask_code']                # (B, S, C)
    mask_final = batch['origin_mask_final']              # (B, S)

    emb_tbl = params['embedding']
    B, S, C = origin_visit.shape
    D = emb_tbl.shape[1]
    L = len(params['layers'])
    dh = D // nhead
    nclass = params['wcls'].shape[1]

    # --- wrapper-side: embedding gather + masked code-sum + positional enc ---
    emb = emb_tbl[origin_visit]                          # (B, S, C, D)
    src = jnp.sum(emb * mask_code[..., None], axis=2)    # (B, S, D)
    src = (src + fixed_positional_encoding(S, D)[None]).astype(jnp.float32)
    mf3 = mask_final.astype(jnp.float32).reshape(B, S, 1)

    # --- per-layer weights stacked on a leading L axis; bf16 for the MXU -----
    def stack(fn):
        return jnp.stack([fn(lp) for lp in params['layers']])

    def head_major_qkv(p):
        wq = p['wq'].reshape(D, nhead, dh)
        wk = p['wk'].reshape(D, nhead, dh)
        wv = p['wv'].reshape(D, nhead, dh)
        return jnp.stack([wq, wk, wv], axis=2).reshape(D, 3 * D)   # head-major cols

    def head_major_bqkv(p):
        bq = p['bq'].reshape(nhead, dh)
        bk = p['bk'].reshape(nhead, dh)
        bv = p['bv'].reshape(nhead, dh)
        return jnp.stack([bq, bk, bv], axis=1).reshape(1, 3 * D)

    wqkv = stack(head_major_qkv).astype(jnp.bfloat16)     # (L, D, 3D)
    bqkv = stack(head_major_bqkv)                         # (L, 1, 3D) f32
    wo = stack(lambda p: p['wo']).astype(jnp.bfloat16)    # (L, D, D)
    bo = stack(lambda p: p['bo'][None, :])
    ln1g = stack(lambda p: p['ln1_g'][None, :])
    ln1b = stack(lambda p: p['ln1_b'][None, :])
    w1 = stack(lambda p: p['w1']).astype(jnp.bfloat16)    # (L, D, F)
    b1 = stack(lambda p: p['b1'][None, :])
    w2 = stack(lambda p: p['w2']).astype(jnp.bfloat16)    # (L, F, D)
    b2 = stack(lambda p: p['b2'][None, :])
    ln2g = stack(lambda p: p['ln2_g'][None, :])
    ln2b = stack(lambda p: p['ln2_b'][None, :])
    F = w1.shape[-1]

    # --- lane-dense head: zero-pad decoder/classifier to 128-lane multiples --
    Dp = _round_up(max(D, 128), 128)
    Cp = _round_up(max(nclass, 128), 128)
    wdec_pad = (jnp.zeros((D, Dp), jnp.float32)
                .at[:, :D].set(params['wdec'])).astype(jnp.bfloat16)
    wcls_pad = (jnp.zeros((Dp, Cp), jnp.float32)
                .at[:D, :nclass].set(params['wcls'])).astype(jnp.bfloat16)
    bcls_pad = jnp.zeros((1, Cp), jnp.float32).at[0, :nclass].set(params['bcls'])

    kernel = functools.partial(_model_kernel, nhead=nhead, S=S, D=D)

    def wspec(shape):     # one layer per grid step along the L axis
        return pl.BlockSpec((None,) + shape, lambda b, l: (l, 0, 0))

    def cspec(shape):     # constant (resident) full-array block
        return pl.BlockSpec(shape, lambda b, l: (0,) * len(shape))

    in_specs = [
        pl.BlockSpec((None, S, D), lambda b, l: (b, 0, 0)),    # src (per batch elem)
        pl.BlockSpec((None, S, 1), lambda b, l: (b, 0, 0)),    # mask_final
        wspec((D, 3 * D)), wspec((1, 3 * D)),                  # wqkv, bqkv
        wspec((D, D)), wspec((1, D)),                          # wo, bo
        wspec((1, D)), wspec((1, D)),                          # ln1 gamma/beta
        wspec((D, F)), wspec((1, F)),                          # w1, b1
        wspec((F, D)), wspec((1, D)),                          # w2, b2
        wspec((1, D)), wspec((1, D)),                          # ln2 gamma/beta
        cspec((D, Dp)), cspec((Dp, Cp)), cspec((1, Cp)),       # wdec, wcls, bcls
    ]
    out_specs = (
        pl.BlockSpec((None, 1, Cp), lambda b, l: (b, 0, 0)),   # logits (padded)
        pl.BlockSpec((None, 1, Dp), lambda b, l: (b, 0, 0)),   # final_visit (padded)
    )

    # right-size VMEM: double-buffered per-layer weights + resident tensors
    per_layer_bytes = sum(int(a.nbytes) // L for a in
                          (wqkv, bqkv, wo, bo, ln1g, ln1b, w1, b1, w2, b2, ln2g, ln2b))
    resident_bytes = int(src.nbytes + mf3.nbytes + wdec_pad.nbytes
                         + wcls_pad.nbytes + bcls_pad.nbytes)
    vmem_limit = int(min(48 * 1024 * 1024,
                         max(8 * 1024 * 1024,
                             4 * per_layer_bytes + 2 * resident_bytes + (4 << 20))))

    logits_pad, fv_pad = pl.pallas_call(
        kernel,
        out_shape=(jax.ShapeDtypeStruct((B, 1, Cp), jnp.float32),
                   jax.ShapeDtypeStruct((B, 1, Dp), jnp.float32)),
        grid=(B, L),
        in_specs=in_specs,
        out_specs=out_specs,
        scratch_shapes=[pltpu.VMEM((S, D), jnp.float32)],      # residual-stream state
        compiler_params=pltpu.CompilerParams(
            dimension_semantics=("parallel", "arbitrary"),
            vmem_limit_bytes=vmem_limit),
    )(src, mf3,
      wqkv, bqkv, wo, bo, ln1g, ln1b, w1, b1, w2, b2, ln2g, ln2b,
      wdec_pad, wcls_pad, bcls_pad)

    classification_result = logits_pad[:, 0, :nclass]
    final_visit = fv_pad[:, 0, :D]
    return classification_result, final_visit


# ---------------------------------------------------------------------------
if __name__ == "__main__":
    B, S, C = 2, 8, 5
    code_size, ninp, nhead, nlayers = 50, 32, 4, 2
    nff = 4 * ninp

    key = jax.random.PRNGKey(0)
    kp, k1, k2, k3, k4 = jax.random.split(key, 5)

    params = init_params(kp, code_size, ninp, nlayers, nff)

    batch = {
        'origin_visit': jax.random.randint(k1, (B, S, C), 0, code_size + 1, dtype=jnp.int32),
        'origin_mask': (jax.random.uniform(k2, (B, S)) > 0.2).astype(jnp.float32),
        'origin_mask_code': (jax.random.uniform(k3, (B, S, C)) > 0.3).astype(jnp.float32),
        'origin_mask_final': (jax.random.uniform(k4, (B, S)) > 0.5).astype(jnp.float32),
    }

    classification_result, final_visit = forward(params, batch, nhead)
    jax.block_until_ready((classification_result, final_visit))

    assert classification_result.shape == (B, 100)
    assert final_visit.shape == (B, ninp)
    assert bool(jnp.all(jnp.isfinite(classification_result)))
    assert bool(jnp.all(jnp.isfinite(final_visit)))
    print("KERNEL_OK")
</pallas_src>

<mosaic_0001>
module attributes {stable_mosaic.version = 11 : i64} {
  func.func @_model_kernel(%arg0: i32, %arg1: i32, %arg2: memref<1x8x32xf32, #tpu.memory_space<vmem>>, %arg3: memref<1x8x1xf32, #tpu.memory_space<vmem>>, %arg4: memref<1x32x96xbf16, #tpu.memory_space<vmem>>, %arg5: memref<1x1x96xf32, #tpu.memory_space<vmem>>, %arg6: memref<1x32x32xbf16, #tpu.memory_space<vmem>>, %arg7: memref<1x1x32xf32, #tpu.memory_space<vmem>>, %arg8: memref<1x1x32xf32, #tpu.memory_space<vmem>>, %arg9: memref<1x1x32xf32, #tpu.memory_space<vmem>>, %arg10: memref<1x32x128xbf16, #tpu.memory_space<vmem>>, %arg11: memref<1x1x128xf32, #tpu.memory_space<vmem>>, %arg12: memref<1x128x32xbf16, #tpu.memory_space<vmem>>, %arg13: memref<1x1x32xf32, #tpu.memory_space<vmem>>, %arg14: memref<1x1x32xf32, #tpu.memory_space<vmem>>, %arg15: memref<1x1x32xf32, #tpu.memory_space<vmem>>, %arg16: memref<32x128xbf16, #tpu.memory_space<vmem>>, %arg17: memref<128x128xbf16, #tpu.memory_space<vmem>>, %arg18: memref<1x128xf32, #tpu.memory_space<vmem>>, %arg19: memref<1x1x128xf32, #tpu.memory_space<vmem>>, %arg20: memref<1x1x128xf32, #tpu.memory_space<vmem>>, %arg21: memref<8x32xf32, #tpu.memory_space<vmem>>) attributes {dimension_semantics = [#tpu.dimension_semantics<parallel>, #tpu.dimension_semantics<arbitrary>], iteration_bounds = array<i64: 2, 2>, scalar_prefetch = 0 : i64, scratch_operands = 1 : i64, tpu.core_type = #tpu.core_type<tc>, window_params = [{transform_indices = @transform_0, window_bounds = array<i64: 1, 8, 32>}, {transform_indices = @transform_1, window_bounds = array<i64: 1, 8, 1>}, {transform_indices = @transform_2, window_bounds = array<i64: 1, 32, 96>}, {transform_indices = @transform_3, window_bounds = array<i64: 1, 1, 96>}, {transform_indices = @transform_4, window_bounds = array<i64: 1, 32, 32>}, {transform_indices = @transform_5, window_bounds = array<i64: 1, 1, 32>}, {transform_indices = @transform_6, window_bounds = array<i64: 1, 1, 32>}, {transform_indices = @transform_7, window_bounds = array<i64: 1, 1, 32>}, {transform_indices = @transform_8, window_bounds = array<i64: 1, 32, 128>}, {transform_indices = @transform_9, window_bounds = array<i64: 1, 1, 128>}, {transform_indices = @transform_10, window_bounds = array<i64: 1, 128, 32>}, {transform_indices = @transform_11, window_bounds = array<i64: 1, 1, 32>}, {transform_indices = @transform_12, window_bounds = array<i64: 1, 1, 32>}, {transform_indices = @transform_13, window_bounds = array<i64: 1, 1, 32>}, {pipeline_mode = #tpu.pipeline_mode<synchronous>, transform_indices = @transform_14, window_bounds = array<i64: 32, 128>}, {pipeline_mode = #tpu.pipeline_mode<synchronous>, transform_indices = @transform_15, window_bounds = array<i64: 128, 128>}, {pipeline_mode = #tpu.pipeline_mode<synchronous>, transform_indices = @transform_16, window_bounds = array<i64: 1, 128>}, {transform_indices = @transform_17, window_bounds = array<i64: 1, 1, 128>}, {transform_indices = @transform_18, window_bounds = array<i64: 1, 1, 128>}]} {
    %c0_i32 = arith.constant 0 : i32
    %0 = arith.cmpi eq, %arg1, %c0_i32 : i32
    %1 = arith.extui %0 : i1 to i32
    %c0_i32_0 = arith.constant 0 : i32
    %2 = arith.cmpi ne, %1, %c0_i32_0 : i32
    scf.if %2 {
      %c0_62 = arith.constant 0 : index
      %c0_63 = arith.constant 0 : index
      %c0_64 = arith.constant 0 : index
      %144 = vector.load %arg2[%c0_62, %c0_63, %c0_64] : memref<1x8x32xf32, #tpu.memory_space<vmem>>, vector<1x8x32xf32>
      %145 = vector.shape_cast %144 : vector<1x8x32xf32> to vector<8x32xf32>
      %c0_65 = arith.constant 0 : index
      %c0_66 = arith.constant 0 : index
      %146 = vector.load %arg21[%c0_65, %c0_66] : memref<8x32xf32, #tpu.memory_space<vmem>>, vector<8x32xf32>
      tpu.vector_store %arg21[%c0_65, %c0_66], %145 {strides = array<i32>} : memref<8x32xf32, #tpu.memory_space<vmem>>, vector<8x32xf32>,
    } else {
    }
    %c0 = arith.constant 0 : index
    %c0_1 = arith.constant 0 : index
    %3 = vector.load %arg21[%c0, %c0_1] : memref<8x32xf32, #tpu.memory_space<vmem>>, vector<8x32xf32>
    %4 = tpu.iota {dimensions = array<i32: 0>} : vector<8x8xi32>
    %5 = tpu.iota {dimensions = array<i32: 1>} : vector<8x8xi32>
    %6 = arith.cmpi sgt, %5, %4 : vector<8x8xi32>
    %cst = arith.constant -1.000000e+09 : f32
    %cst_2 = arith.constant 0.000000e+00 : f32
    %7 = vector.broadcast %cst : f32 to vector<8x8xf32>
    %8 = vector.broadcast %cst_2 : f32 to vector<8x8xf32>
    %9 = arith.select %6, %7, %8 : vector<8x8xi1>, vector<8x8xf32>
    %10 = arith.truncf %3 : vector<8x32xf32> to vector<8x32xbf16>
    %c0_3 = arith.constant 0 : index
    %c0_4 = arith.constant 0 : index
    %c0_5 = arith.constant 0 : index
    %11 = vector.load %arg4[%c0_3, %c0_4, %c0_5] : memref<1x32x96xbf16, #tpu.memory_space<vmem>>, vector<1x32x96xbf16>
    %12 = vector.shape_cast %11 : vector<1x32x96xbf16> to vector<32x96xbf16>
    %cst_6 = arith.constant dense<0.000000e+00> : vector<8x96xf32>
    %13 = tpu.matmul %10, %12, %cst_6 {dimension_numbers = #tpu.dot_dimension_numbers<[1], [0], [0], [1], [0, 0, 1, 1], [], []>} : vector<8x32xbf16>, vector<32x96xbf16>, vector<8x96xf32> -> vector<8x96xf32>
    %c0_7 = arith.constant 0 : index
    %c0_8 = arith.constant 0 : index
    %c0_9 = arith.constant 0 : index
    %14 = vector.load %arg5[%c0_7, %c0_8, %c0_9] : memref<1x1x96xf32, #tpu.memory_space<vmem>>, vector<1x1x96xf32>
    %15 = vector.shape_cast %14 : vector<1x1x96xf32> to vector<1x96xf32>
    %16 = vector.broadcast %15 : vector<1x96xf32> to vector<8x96xf32>
    %17 = arith.addf %13, %16 : vector<8x96xf32>
    %18 = vector.extract_strided_slice %17 {offsets = [0, 0], sizes = [8, 24], strides = [1, 1]} : vector<8x96xf32> to vector<8x24xf32>
    %19 = vector.extract_strided_slice %17 {offsets = [0, 24], sizes = [8, 24], strides = [1, 1]} : vector<8x96xf32> to vector<8x24xf32>
    %20 = vector.extract_strided_slice %17 {offsets = [0, 48], sizes = [8, 24], strides = [1, 1]} : vector<8x96xf32> to vector<8x24xf32>
    %21 = vector.extract_strided_slice %17 {offsets = [0, 72], sizes = [8, 24], strides = [1, 1]} : vector<8x96xf32> to vector<8x24xf32>
    %22 = vector.shape_cast %18 : vector<8x24xf32> to vector<1x8x24xf32>
    %23 = vector.shape_cast %19 : vector<8x24xf32> to vector<1x8x24xf32>
    %24 = vector.shape_cast %20 : vector<8x24xf32> to vector<1x8x24xf32>
    %25 = vector.shape_cast %21 : vector<8x24xf32> to vector<1x8x24xf32>
    %26 = tpu.concatenate %22, %23, %24, %25 in 0 : vector<1x8x24xf32>, vector<1x8x24xf32>, vector<1x8x24xf32>, vector<1x8x24xf32> -> vector<4x8x24xf32>
    %27 = vector.extract_strided_slice %26 {offsets = [0, 0, 0], sizes = [4, 8, 8], strides = [1, 1, 1]} : vector<4x8x24xf32> to vector<4x8x8xf32>
    %28 = arith.truncf %27 : vector<4x8x8xf32> to vector<4x8x8xbf16>
    %29 = vector.extract_strided_slice %26 {offsets = [0, 0, 8], sizes = [4, 8, 8], strides = [1, 1, 1]} : vector<4x8x24xf32> to vector<4x8x8xf32>
    %30 = arith.truncf %29 : vector<4x8x8xf32> to vector<4x8x8xbf16>
    %31 = vector.extract_strided_slice %26 {offsets = [0, 0, 16], sizes = [4, 8, 8], strides = [1, 1, 1]} : vector<4x8x24xf32> to vector<4x8x8xf32>
    %32 = arith.truncf %31 : vector<4x8x8xf32> to vector<4x8x8xbf16>
    "tpu.trace_start"() <{level = 10 : i32, message = "hqd,hkd->hqk"}> : () -> ()
    %cst_10 = arith.constant dense<0.000000e+00> : vector<4x8x8xf32>
    %33 = tpu.matmul %28, %30, %cst_10 {dimension_numbers = #tpu.dot_dimension_numbers<[2], [2], [1], [1], [0, 0, 0, 1, 1, 1], [0], [0]>} : vector<4x8x8xbf16>, vector<4x8x8xbf16>, vector<4x8x8xf32> -> vector<4x8x8xf32>
    "tpu.trace_stop"() : () -> ()
    %cst_11 = arith.constant 0.353553385 : f32
    %34 = vector.broadcast %cst_11 : f32 to vector<4x8x8xf32>
    %35 = arith.mulf %33, %34 : vector<4x8x8xf32>
    %36 = vector.shape_cast %9 : vector<8x8xf32> to vector<1x8x8xf32>
    %37 = vector.broadcast %36 : vector<1x8x8xf32> to vector<4x8x8xf32>
    %38 = arith.addf %35, %37 : vector<4x8x8xf32>
    %cst_12 = arith.constant dense<0xFF800000> : vector<4x8xf32>
    %39 = vector.multi_reduction <maximumf>, %38, %cst_12 [2] : vector<4x8x8xf32> to vector<4x8xf32>
    %40 = vector.shape_cast %39 : vector<4x8xf32> to vector<4x8x1xf32>
    %41 = vector.broadcast %40 : vector<4x8x1xf32> to vector<4x8x8xf32>
    %42 = arith.subf %38, %41 : vector<4x8x8xf32>
    %43 = math.exp %42 : vector<4x8x8xf32>
    %cst_13 = arith.constant dense<0.000000e+00> : vector<4x8xf32>
    %44 = vector.multi_reduction <add>, %43, %cst_13 [2] : vector<4x8x8xf32> to vector<4x8xf32>
    %45 = vector.shape_cast %44 : vector<4x8xf32> to vector<4x8x1xf32>
    %46 = tpu.reciprocal %45 {approx = true} : vector<4x8x1xf32> -> vector<4x8x1xf32>
    %47 = vector.broadcast %46 : vector<4x8x1xf32> to vector<4x8x8xf32>
    %48 = arith.mulf %43, %47 : vector<4x8x8xf32>
    %49 = arith.truncf %48 : vector<4x8x8xf32> to vector<4x8x8xbf16>
    "tpu.trace_start"() <{level = 10 : i32, message = "hqk,hkd->hqd"}> : () -> ()
    %cst_14 = arith.constant dense<0.000000e+00> : vector<4x8x8xf32>
    %50 = tpu.matmul %49, %32, %cst_14 {dimension_numbers = #tpu.dot_dimension_numbers<[2], [1], [1], [2], [0, 0, 0, 1, 1, 2], [0], [0]>} : vector<4x8x8xbf16>, vector<4x8x8xbf16>, vector<4x8x8xf32> -> vector<4x8x8xf32>
    "tpu.trace_stop"() : () -> ()
    %51 = vector.extract_strided_slice %50 {offsets = [0, 0, 0], sizes = [1, 8, 8], strides = [1, 1, 1]} : vector<4x8x8xf32> to vector<1x8x8xf32>
    %52 = vector.shape_cast %51 : vector<1x8x8xf32> to vector<8x8xf32>
    %53 = vector.extract_strided_slice %50 {offsets = [1, 0, 0], sizes = [1, 8, 8], strides = [1, 1, 1]} : vector<4x8x8xf32> to vector<1x8x8xf32>
    %54 = vector.shape_cast %53 : vector<1x8x8xf32> to vector<8x8xf32>
    %55 = vector.extract_strided_slice %50 {offsets = [2, 0, 0], sizes = [1, 8, 8], strides = [1, 1, 1]} : vector<4x8x8xf32> to vector<1x8x8xf32>
    %56 = vector.shape_cast %55 : vector<1x8x8xf32> to vector<8x8xf32>
    %57 = vector.extract_strided_slice %50 {offsets = [3, 0, 0], sizes = [1, 8, 8], strides = [1, 1, 1]} : vector<4x8x8xf32> to vector<1x8x8xf32>
    %58 = vector.shape_cast %57 : vector<1x8x8xf32> to vector<8x8xf32>
    %59 = tpu.concatenate %52, %54, %56, %58 in 1 : vector<8x8xf32>, vector<8x8xf32>, vector<8x8xf32>, vector<8x8xf32> -> vector<8x32xf32>
    %60 = arith.truncf %59 : vector<8x32xf32> to vector<8x32xbf16>
    %c0_15 = arith.constant 0 : index
    %c0_16 = arith.constant 0 : index
    %c0_17 = arith.constant 0 : index
    %61 = vector.load %arg6[%c0_15, %c0_16, %c0_17] : memref<1x32x32xbf16, #tpu.memory_space<vmem>>, vector<1x32x32xbf16>
    %62 = vector.shape_cast %61 : vector<1x32x32xbf16> to vector<32x32xbf16>
    %cst_18 = arith.constant dense<0.000000e+00> : vector<8x32xf32>
    %63 = tpu.matmul %60, %62, %cst_18 {dimension_numbers = #tpu.dot_dimension_numbers<[1], [0], [0], [1], [0, 0, 1, 1], [], []>} : vector<8x32xbf16>, vector<32x32xbf16>, vector<8x32xf32> -> vector<8x32xf32>
    %c0_19 = arith.constant 0 : index
    %c0_20 = arith.constant 0 : index
    %c0_21 = arith.constant 0 : index
    %64 = vector.load %arg7[%c0_19, %c0_20, %c0_21] : memref<1x1x32xf32, #tpu.memory_space<vmem>>, vector<1x1x32xf32>
    %65 = vector.shape_cast %64 : vector<1x1x32xf32> to vector<1x32xf32>
    %66 = vector.broadcast %65 : vector<1x32xf32> to vector<8x32xf32>
    %67 = arith.addf %63, %66 : vector<8x32xf32>
    %68 = arith.addf %3, %67 : vector<8x32xf32>
    %c0_22 = arith.constant 0 : index
    %c0_23 = arith.constant 0 : index
    %c0_24 = arith.constant 0 : index
    %69 = vector.load %arg8[%c0_22, %c0_23, %c0_24] : memref<1x1x32xf32, #tpu.memory_space<vmem>>, vector<1x1x32xf32>
    %70 = vector.shape_cast %69 : vector<1x1x32xf32> to vector<1x32xf32>
    %c0_25 = arith.constant 0 : index
    %c0_26 = arith.constant 0 : index
    %c0_27 = arith.constant 0 : index
    %71 = vector.load %arg9[%c0_25, %c0_26, %c0_27] : memref<1x1x32xf32, #tpu.memory_space<vmem>>, vector<1x1x32xf32>
    %72 = vector.shape_cast %71 : vector<1x1x32xf32> to vector<1x32xf32>
    %cst_28 = arith.constant dense<0.000000e+00> : vector<8xf32>
    %73 = vector.multi_reduction <add>, %68, %cst_28 [1] : vector<8x32xf32> to vector<8xf32>
    %74 = vector.shape_cast %73 : vector<8xf32> to vector<8x1xf32>
    %cst_29 = arith.constant 3.200000e+01 : f32
    %75 = vector.broadcast %cst_29 : f32 to vector<8x1xf32>
    %76 = arith.divf %74, %75 : vector<8x1xf32>
    %77 = vector.broadcast %76 : vector<8x1xf32> to vector<8x32xf32>
    %78 = arith.subf %68, %77 : vector<8x32xf32>
    %79 = arith.mulf %78, %78 : vector<8x32xf32>
    %cst_30 = arith.constant dense<0.000000e+00> : vector<8xf32>
    %80 = vector.multi_reduction <add>, %79, %cst_30 [1] : vector<8x32xf32> to vector<8xf32>
    %81 = vector.shape_cast %80 : vector<8xf32> to vector<8x1xf32>
    %cst_31 = arith.constant 3.200000e+01 : f32
    %82 = vector.broadcast %cst_31 : f32 to vector<8x1xf32>
    %83 = arith.divf %81, %82 : vector<8x1xf32>
    %84 = vector.broadcast %76 : vector<8x1xf32> to vector<8x32xf32>
    %85 = arith.subf %68, %84 : vector<8x32xf32>
    %cst_32 = arith.constant 9.99999974E-6 : f32
    %86 = vector.broadcast %cst_32 : f32 to vector<8x1xf32>
    %87 = arith.addf %83, %86 : vector<8x1xf32>
    %88 = math.rsqrt %87 : vector<8x1xf32>
    %89 = vector.broadcast %88 : vector<8x1xf32> to vector<8x32xf32>
    %90 = arith.mulf %85, %89 : vector<8x32xf32>
    %91 = vector.broadcast %70 : vector<1x32xf32> to vector<8x32xf32>
    %92 = arith.mulf %90, %91 : vector<8x32xf32>
    %93 = vector.broadcast %72 : vector<1x32xf32> to vector<8x32xf32>
    %94 = arith.addf %92, %93 : vector<8x32xf32>
    %95 = arith.truncf %94 : vector<8x32xf32> to vector<8x32xbf16>
    %c0_33 = arith.constant 0 : index
    %c0_34 = arith.constant 0 : index
    %c0_35 = arith.constant 0 : index
    %96 = vector.load %arg10[%c0_33, %c0_34, %c0_35] : memref<1x32x128xbf16, #tpu.memory_space<vmem>>, vector<1x32x128xbf16>
    %97 = vector.shape_cast %96 : vector<1x32x128xbf16> to vector<32x128xbf16>
    %cst_36 = arith.constant dense<0.000000e+00> : vector<8x128xf32>
    %98 = tpu.matmul %95, %97, %cst_36 {dimension_numbers = #tpu.dot_dimension_numbers<[1], [0], [0], [1], [0, 0, 1, 1], [], []>} : vector<8x32xbf16>, vector<32x128xbf16>, vector<8x128xf32> -> vector<8x128xf32>
    %c0_37 = arith.constant 0 : index
    %c0_38 = arith.constant 0 : index
    %c0_39 = arith.constant 0 : index
    %99 = vector.load %arg11[%c0_37, %c0_38, %c0_39] : memref<1x1x128xf32, #tpu.memory_space<vmem>>, vector<1x1x128xf32>
    %100 = vector.shape_cast %99 : vector<1x1x128xf32> to vector<1x128xf32>
    %101 = vector.broadcast %100 : vector<1x128xf32> to vector<8x128xf32>
    %102 = arith.addf %98, %101 : vector<8x128xf32>
    %cst_40 = arith.constant 0.000000e+00 : f32
    %103 = vector.broadcast %cst_40 : f32 to vector<8x128xf32>
    %104 = arith.maximumf %102, %103 : vector<8x128xf32>
    %105 = arith.truncf %104 : vector<8x128xf32> to vector<8x128xbf16>
    %c0_41 = arith.constant 0 : index
    %c0_42 = arith.constant 0 : index
    %c0_43 = arith.constant 0 : index
    %106 = vector.load %arg12[%c0_41, %c0_42, %c0_43] : memref<1x128x32xbf16, #tpu.memory_space<vmem>>, vector<1x128x32xbf16>
    %107 = vector.shape_cast %106 : vector<1x128x32xbf16> to vector<128x32xbf16>
    %cst_44 = arith.constant dense<0.000000e+00> : vector<8x32xf32>
    %108 = tpu.matmul %105, %107, %cst_44 {dimension_numbers = #tpu.dot_dimension_numbers<[1], [0], [0], [1], [0, 0, 1, 1], [], []>} : vector<8x128xbf16>, vector<128x32xbf16>, vector<8x32xf32> -> vector<8x32xf32>
    %c0_45 = arith.constant 0 : index
    %c0_46 = arith.constant 0 : index
    %c0_47 = arith.constant 0 : index
    %109 = vector.load %arg13[%c0_45, %c0_46, %c0_47] : memref<1x1x32xf32, #tpu.memory_space<vmem>>, vector<1x1x32xf32>
    %110 = vector.shape_cast %109 : vector<1x1x32xf32> to vector<1x32xf32>
    %111 = vector.broadcast %110 : vector<1x32xf32> to vector<8x32xf32>
    %112 = arith.addf %108, %111 : vector<8x32xf32>
    %113 = arith.addf %94, %112 : vector<8x32xf32>
    %c0_48 = arith.constant 0 : index
    %c0_49 = arith.constant 0 : index
    %c0_50 = arith.constant 0 : index
    %114 = vector.load %arg14[%c0_48, %c0_49, %c0_50] : memref<1x1x32xf32, #tpu.memory_space<vmem>>, vector<1x1x32xf32>
    %115 = vector.shape_cast %114 : vector<1x1x32xf32> to vector<1x32xf32>
    %c0_51 = arith.constant 0 : index
    %c0_52 = arith.constant 0 : index
    %c0_53 = arith.constant 0 : index
    %116 = vector.load %arg15[%c0_51, %c0_52, %c0_53] : memref<1x1x32xf32, #tpu.memory_space<vmem>>, vector<1x1x32xf32>
    %117 = vector.shape_cast %116 : vector<1x1x32xf32> to vector<1x32xf32>
    %cst_54 = arith.constant dense<0.000000e+00> : vector<8xf32>
    %118 = vector.multi_reduction <add>, %113, %cst_54 [1] : vector<8x32xf32> to vector<8xf32>
    %119 = vector.shape_cast %118 : vector<8xf32> to vector<8x1xf32>
    %cst_55 = arith.constant 3.200000e+01 : f32
    %120 = vector.broadcast %cst_55 : f32 to vector<8x1xf32>
    %121 = arith.divf %119, %120 : vector<8x1xf32>
    %122 = vector.broadcast %121 : vector<8x1xf32> to vector<8x32xf32>
    %123 = arith.subf %113, %122 : vector<8x32xf32>
    %124 = arith.mulf %123, %123 : vector<8x32xf32>
    %cst_56 = arith.constant dense<0.000000e+00> : vector<8xf32>
    %125 = vector.multi_reduction <add>, %124, %cst_56 [1] : vector<8x32xf32> to vector<8xf32>
    %126 = vector.shape_cast %125 : vector<8xf32> to vector<8x1xf32>
    %cst_57 = arith.constant 3.200000e+01 : f32
    %127 = vector.broadcast %cst_57 : f32 to vector<8x1xf32>
    %128 = arith.divf %126, %127 : vector<8x1xf32>
    %129 = vector.broadcast %121 : vector<8x1xf32> to vector<8x32xf32>
    %130 = arith.subf %113, %129 : vector<8x32xf32>
    %cst_58 = arith.constant 9.99999974E-6 : f32
    %131 = vector.broadcast %cst_58 : f32 to vector<8x1xf32>
    %132 = arith.addf %128, %131 : vector<8x1xf32>
    %133 = math.rsqrt %132 : vector<8x1xf32>
    %134 = vector.broadcast %133 : vector<8x1xf32> to vector<8x32xf32>
    %135 = arith.mulf %130, %134 : vector<8x32xf32>
    %136 = vector.broadcast %115 : vector<1x32xf32> to vector<8x32xf32>
    %137 = arith.mulf %135, %136 : vector<8x32xf32>
    %138 = vector.broadcast %117 : vector<1x32xf32> to vector<8x32xf32>
    %139 = arith.addf %137, %138 : vector<8x32xf32>
    %c0_59 = arith.constant 0 : index
    %c0_60 = arith.constant 0 : index
    %140 = vector.load %arg21[%c0_59, %c0_60] : memref<8x32xf32, #tpu.memory_space<vmem>>, vector<8x32xf32>
    tpu.vector_store %arg21[%c0_59, %c0_60], %139 {strides = array<i32>} : memref<8x32xf32, #tpu.memory_space<vmem>>, vector<8x32xf32>,
    %c1_i32 = arith.constant 1 : i32
    %141 = arith.cmpi eq, %arg1, %c1_i32 : i32
    %142 = arith.extui %141 : i1 to i32
    %c0_i32_61 = arith.constant 0 : i32
    %143 = arith.cmpi ne, %142, %c0_i32_61 : i32
    scf.if %143 {
      %144 = arith.truncf %139 : vector<8x32xf32> to vector<8x32xbf16>
      %c0_62 = arith.constant 0 : index
      %c0_63 = arith.constant 0 : index
      %145 = vector.load %arg16[%c0_62, %c0_63] : memref<32x128xbf16, #tpu.memory_space<vmem>>, vector<32x128xbf16>
      %cst_64 = arith.constant dense<0.000000e+00> : vector<8x128xf32>
      %146 = tpu.matmul %144, %145, %cst_64 {dimension_numbers = #tpu.dot_dimension_numbers<[1], [0], [0], [1], [0, 0, 1, 1], [], []>} : vector<8x32xbf16>, vector<32x128xbf16>, vector<8x128xf32> -> vector<8x128xf32>
      %c0_65 = arith.constant 0 : index
      %c0_66 = arith.constant 0 : index
      %c0_67 = arith.constant 0 : index
      %147 = vector.load %arg3[%c0_65, %c0_66, %c0_67] : memref<1x8x1xf32, #tpu.memory_space<vmem>>, vector<1x8x1xf32>
      %148 = vector.shape_cast %147 : vector<1x8x1xf32> to vector<8x1xf32>
      %149 = vector.broadcast %148 : vector<8x1xf32> to vector<8x128xf32>
      %150 = arith.mulf %146, %149 : vector<8x128xf32>
      %cst_68 = arith.constant dense<0.000000e+00> : vector<128xf32>
      %151 = vector.multi_reduction <add>, %150, %cst_68 [0] : vector<8x128xf32> to vector<128xf32>
      %152 = vector.shape_cast %151 : vector<128xf32> to vector<1x128xf32>
      %cst_69 = arith.constant 1.250000e-01 : f32
      %153 = vector.broadcast %cst_69 : f32 to vector<1x128xf32>
      %154 = arith.mulf %152, %153 : vector<1x128xf32>
      %c0_70 = arith.constant 0 : index
      %c0_71 = arith.constant 0 : index
      %c0_72 = arith.constant 0 : index
      %155 = vector.load %arg20[%c0_70, %c0_71, %c0_72] : memref<1x1x128xf32, #tpu.memory_space<vmem>>, vector<1x1x128xf32>
      %156 = vector.shape_cast %155 : vector<1x1x128xf32> to vector<1x128xf32>
      %157 = vector.shape_cast %154 : vector<1x128xf32> to vector<1x1x128xf32>
      tpu.vector_store %arg20[%c0_70, %c0_71, %c0_72], %157 {strides = array<i32>} : memref<1x1x128xf32, #tpu.memory_space<vmem>>, vector<1x1x128xf32>,
      %158 = arith.truncf %154 : vector<1x128xf32> to vector<1x128xbf16>
      %c0_73 = arith.constant 0 : index
      %c0_74 = arith.constant 0 : index
      %159 = vector.load %arg17[%c0_73, %c0_74] : memref<128x128xbf16, #tpu.memory_space<vmem>>, vector<128x128xbf16>
      %cst_75 = arith.constant dense<0.000000e+00> : vector<1x128xf32>
      %160 = tpu.matmul %158, %159, %cst_75 {dimension_numbers = #tpu.dot_dimension_numbers<[1], [0], [0], [1], [0, 0, 1, 1], [], []>} : vector<1x128xbf16>, vector<128x128xbf16>, vector<1x128xf32> -> vector<1x128xf32>
      %c0_76 = arith.constant 0 : index
      %c0_77 = arith.constant 0 : index
      %161 = vector.load %arg18[%c0_76, %c0_77] : memref<1x128xf32, #tpu.memory_space<vmem>>, vector<1x128xf32>
      %162 = arith.addf %160, %161 : vector<1x128xf32>
      %c0_78 = arith.constant 0 : index
      %c0_79 = arith.constant 0 : index
      %c0_80 = arith.constant 0 : index
      %163 = vector.load %arg19[%c0_78, %c0_79, %c0_80] : memref<1x1x128xf32, #tpu.memory_space<vmem>>, vector<1x1x128xf32>
      %164 = vector.shape_cast %163 : vector<1x1x128xf32> to vector<1x128xf32>
      %165 = vector.shape_cast %162 : vector<1x128xf32> to vector<1x1x128xf32>
      tpu.vector_store %arg19[%c0_78, %c0_79, %c0_80], %165 {strides = array<i32>} : memref<1x1x128xf32, #tpu.memory_space<vmem>>, vector<1x1x128xf32>,
    } else {
    }
    return
  }
  func.func @transform_0(%arg0: i32, %arg1: i32) -> (i32, i32, i32) {
    %c0_i32 = arith.constant 0 : i32
    %c0_i32_0 = arith.constant 0 : i32
    %c0_i32_1 = arith.constant 0 : i32
    return %arg0, %c0_i32, %c0_i32_0 : i32, i32, i32
  }
  func.func @transform_1(%arg0: i32, %arg1: i32) -> (i32, i32, i32) {
    %c0_i32 = arith.constant 0 : i32
    %c0_i32_0 = arith.constant 0 : i32
    %c0_i32_1 = arith.constant 0 : i32
    return %arg0, %c0_i32, %c0_i32_0 : i32, i32, i32
  }
  func.func @transform_2(%arg0: i32, %arg1: i32) -> (i32, i32, i32) {
    %c0_i32 = arith.constant 0 : i32
    %c0_i32_0 = arith.constant 0 : i32
    %c0_i32_1 = arith.constant 0 : i32
    return %arg1, %c0_i32, %c0_i32_0 : i32, i32, i32
  }
  func.func @transform_3(%arg0: i32, %arg1: i32) -> (i32, i32, i32) {
    %c0_i32 = arith.constant 0 : i32
    %c0_i32_0 = arith.constant 0 : i32
    %c0_i32_1 = arith.constant 0 : i32
    return %arg1, %c0_i32, %c0_i32_0 : i32, i32, i32
  }
  func.func @transform_4(%arg0: i32, %arg1: i32) -> (i32, i32, i32) {
    %c0_i32 = arith.constant 0 : i32
    %c0_i32_0 = arith.constant 0 : i32
    %c0_i32_1 = arith.constant 0 : i32
    return %arg1, %c0_i32, %c0_i32_0 : i32, i32, i32
  }
  func.func @transform_5(%arg0: i32, %arg1: i32) -> (i32, i32, i32) {
    %c0_i32 = arith.constant 0 : i32
    %c0_i32_0 = arith.constant 0 : i32
    %c0_i32_1 = arith.constant 0 : i32
    return %arg1, %c0_i32, %c0_i32_0 : i32, i32, i32
  }
  func.func @transform_6(%arg0: i32, %arg1: i32) -> (i32, i32, i32) {
    %c0_i32 = arith.constant 0 : i32
    %c0_i32_0 = arith.constant 0 : i32
    %c0_i32_1 = arith.constant 0 : i32
    return %arg1, %c0_i32, %c0_i32_0 : i32, i32, i32
  }
  func.func @transform_7(%arg0: i32, %arg1: i32) -> (i32, i32, i32) {
    %c0_i32 = arith.constant 0 : i32
    %c0_i32_0 = arith.constant 0 : i32
    %c0_i32_1 = arith.constant 0 : i32
    return %arg1, %c0_i32, %c0_i32_0 : i32, i32, i32
  }
  func.func @transform_8(%arg0: i32, %arg1: i32) -> (i32, i32, i32) {
    %c0_i32 = arith.constant 0 : i32
    %c0_i32_0 = arith.constant 0 : i32
    %c0_i32_1 = arith.constant 0 : i32
    return %arg1, %c0_i32, %c0_i32_0 : i32, i32, i32
  }
  func.func @transform_9(%arg0: i32, %arg1: i32) -> (i32, i32, i32) {
    %c0_i32 = arith.constant 0 : i32
    %c0_i32_0 = arith.constant 0 : i32
    %c0_i32_1 = arith.constant 0 : i32
    return %arg1, %c0_i32, %c0_i32_0 : i32, i32, i32
  }
  func.func @transform_10(%arg0: i32, %arg1: i32) -> (i32, i32, i32) {
    %c0_i32 = arith.constant 0 : i32
    %c0_i32_0 = arith.constant 0 : i32
    %c0_i32_1 = arith.constant 0 : i32
    return %arg1, %c0_i32, %c0_i32_0 : i32, i32, i32
  }
  func.func @transform_11(%arg0: i32, %arg1: i32) -> (i32, i32, i32) {
    %c0_i32 = arith.constant 0 : i32
    %c0_i32_0 = arith.constant 0 : i32
    %c0_i32_1 = arith.constant 0 : i32
    return %arg1, %c0_i32, %c0_i32_0 : i32, i32, i32
  }
  func.func @transform_12(%arg0: i32, %arg1: i32) -> (i32, i32, i32) {
    %c0_i32 = arith.constant 0 : i32
    %c0_i32_0 = arith.constant 0 : i32
    %c0_i32_1 = arith.constant 0 : i32
    return %arg1, %c0_i32, %c0_i32_0 : i32, i32, i32
  }
  func.func @transform_13(%arg0: i32, %arg1: i32) -> (i32, i32, i32) {
    %c0_i32 = arith.constant 0 : i32
    %c0_i32_0 = arith.constant 0 : i32
    %c0_i32_1 = arith.constant 0 : i32
    return %arg1, %c0_i32, %c0_i32_0 : i32, i32, i32
  }
  func.func @transform_14(%arg0: i32, %arg1: i32) -> (i32, i32) {
    %c0_i32 = arith.constant 0 : i32
    %c0_i32_0 = arith.constant 0 : i32
    %c0_i32_1 = arith.constant 0 : i32
    return %c0_i32, %c0_i32_0 : i32, i32
  }
  func.func @transform_15(%arg0: i32, %arg1: i32) -> (i32, i32) {
    %c0_i32 = arith.constant 0 : i32
    %c0_i32_0 = arith.constant 0 : i32
    %c0_i32_1 = arith.constant 0 : i32
    return %c0_i32, %c0_i32_0 : i32, i32
  }
  func.func @transform_16(%arg0: i32, %arg1: i32) -> (i32, i32) {
    %c0_i32 = arith.constant 0 : i32
    %c0_i32_0 = arith.constant 0 : i32
    %c0_i32_1 = arith.constant 0 : i32
    return %c0_i32, %c0_i32_0 : i32, i32
  }
  func.func @transform_17(%arg0: i32, %arg1: i32) -> (i32, i32, i32) {
    %c0_i32 = arith.constant 0 : i32
    %c0_i32_0 = arith.constant 0 : i32
    %c0_i32_1 = arith.constant 0 : i32
    return %arg0, %c0_i32, %c0_i32_0 : i32, i32, i32
  }
  func.func @transform_18(%arg0: i32, %arg1: i32) -> (i32, i32, i32) {
    %c0_i32 = arith.constant 0 : i32
    %c0_i32_0 = arith.constant 0 : i32
    %c0_i32_1 = arith.constant 0 : i32
    return %arg0, %c0_i32, %c0_i32_0 : i32, i32, i32
  }
}

</mosaic_0001>

<llo_original>
// kernel: tpu_custom_call.1
$region0: #{tpu_custom_call.1}
  #allocation0 [shape = 'u32[]', space=smem, size = 0x4, offset = 0x4, fixed_abs, tag = 'smem constant byte address 0x4 - core index']
  #allocation1 [shape = 'u32[144,128]{1,0:T(1,128)}', space=vmem, size = 0x12000, scoped, tag = 'internal scratch']
  #allocation2 [shape = 'f32[8,32]{1,0:T(8,128)}', space=vmem, size = 0x1000, scoped, tag = 'scratch operand']
  %s0 = inlined_call_operand.vmem [shape: f32[2,8,32], index: 0, kind: input, shape index: {}]
  %s1 = inlined_call_operand.vmem [shape: f32[2,8,1], index: 1, kind: input, shape index: {}]
  %s2 = inlined_call_operand.vmem [shape: bf16[2,32,96], index: 2, kind: input, shape index: {}]
  %s3 = inlined_call_operand.vmem [shape: f32[2,1,96], index: 3, kind: input, shape index: {}]
  %s4 = inlined_call_operand.vmem [shape: bf16[2,32,32], index: 4, kind: input, shape index: {}]
  %s5 = inlined_call_operand.hbm [shape: f32[2,1,32], index: 5, kind: input, shape index: {}]
  %s6 = inlined_call_operand.hbm [shape: f32[2,1,32], index: 6, kind: input, shape index: {}]
  %s7 = inlined_call_operand.hbm [shape: f32[2,1,32], index: 7, kind: input, shape index: {}]
  %s8 = inlined_call_operand.vmem [shape: bf16[2,32,128], index: 8, kind: input, shape index: {}]
  %s9 = inlined_call_operand.hbm [shape: f32[2,1,128], index: 9, kind: input, shape index: {}]
  %s10 = inlined_call_operand.vmem [shape: bf16[2,128,32], index: 10, kind: input, shape index: {}]
  %s11 = inlined_call_operand.hbm [shape: f32[2,1,32], index: 11, kind: input, shape index: {}]
  %s12 = inlined_call_operand.hbm [shape: f32[2,1,32], index: 12, kind: input, shape index: {}]
  %s13 = inlined_call_operand.hbm [shape: f32[2,1,32], index: 13, kind: input, shape index: {}]
  %s14 = inlined_call_operand.vmem [shape: bf16[32,128], index: 14, kind: input, shape index: {}]
  %s15 = inlined_call_operand.vmem [shape: bf16[128,128], index: 15, kind: input, shape index: {}]
  %s16 = inlined_call_operand.vmem [shape: f32[1,128], index: 16, kind: input, shape index: {}]
  %s17 = inlined_call_operand.hbm [shape: f32[2,1,128], index: 17, kind: output, shape index: {0}]
  %s18 = inlined_call_operand.hbm [shape: f32[2,1,128], index: 18, kind: output, shape index: {1}]
  %19 = xla_tuple %s17, %s18
  %s20 = sld [smem:[#allocation0]]
  $region145: #{tpu_custom_call.1} parent=0
    _
  %s22 = ssub.s32 1, %s20
  %s23 = scalar_select 0, %s22, %s20
  $region1: #{tpu_custom_call.1} parent=0
    #allocation3 [shape = 'u8[1024]{0}', space=vmem, size = 0x400, scoped, tag = 'input window, operand 5']
    #allocation4 [shape = 's32[2]{0}', space=sflag, size = 0x8, scoped, tag = 'scoped memory for tpu_custom_call.1']
    #allocation5 [shape = 's32[2]{0}', space=sflag, size = 0x8, scoped, tag = 'scoped memory for tpu_custom_call.1']
    #allocation6 [shape = 'u8[1024]{0}', space=vmem, size = 0x400, scoped, tag = 'input window, operand 6']
    #allocation7 [shape = 's32[2]{0}', space=sflag, size = 0x8, scoped, tag = 'scoped memory for tpu_custom_call.1']
    #allocation8 [shape = 'u8[1024]{0}', space=vmem, size = 0x400, scoped, tag = 'input window, operand 7']
    #allocation9 [shape = 'u8[1024]{0}', space=vmem, size = 0x400, scoped, tag = 'input window, operand 9']
    #allocation10 [shape = 's32[2]{0}', space=sflag, size = 0x8, scoped, tag = 'scoped memory for tpu_custom_call.1']
    #allocation11 [shape = 'u8[1024]{0}', space=vmem, size = 0x400, scoped, tag = 'input window, operand 11']
    #allocation12 [shape = 'u8[1024]{0}', space=vmem, size = 0x400, scoped, tag = 'input window, operand 12']
    #allocation13 [shape = 's32[2]{0}', space=sflag, size = 0x8, scoped, tag = 'scoped memory for tpu_custom_call.1']
    #allocation14 [shape = 'u8[1024]{0}', space=vmem, size = 0x400, scoped, tag = 'input window, operand 13']
    #allocation15 [shape = 'u8[1024]{0}', space=vmem, size = 0x400, scoped, tag = 'output window, operand 0']
    #allocation16 [shape = 'u8[1024]{0}', space=vmem, size = 0x400, scoped, tag = 'output window, operand 1']
    #allocation17 [shape = 's32[2]{0}', space=sflag, size = 0x8, scoped, tag = 'scoped memory for tpu_custom_call.1']
    %24 = vsyncpa [#allocation4], 0
    %s25 = scalar_lea.sflag [#allocation4], 1
    %26 = vsyncpa %s25, 0
    %27 = vsyncpa [#allocation7], 0
    %s28 = scalar_lea.sflag [#allocation7], 1
    %29 = vsyncpa %s28, 0
    %30 = vsyncpa [#allocation10], 0
    %s31 = scalar_lea.sflag [#allocation10], 1
    %32 = vsyncpa %s31, 0
    %33 = vsyncpa [#allocation13], 0
    %s34 = scalar_lea.sflag [#allocation13], 1
    %35 = vsyncpa %s34, 0
    %36 = vsyncpa [#allocation5], 0
    %s37 = scalar_lea.sflag [#allocation5], 1
    %38 = vsyncpa %s37, 0
    %39 = vsyncpa [#allocation17], 0
    %s40 = scalar_lea.sflag [#allocation17], 1
    %41 = vsyncpa %s40, 0
    loop: start=0, step=1, limit=6
    $region2: #{tpu_custom_call.1} parent=1 // loop_pre_header
      _
    $region3: #{tpu_custom_call.1} parent=1 // loop_header
      %s43 = sphi 0, %s47
      %p44 = scmp.ge.s32.totalorder %s43, 6
      %s50 = sphi 0, %s62
      %s51 = sphi 0, %s58
      %s52 = sphi 0, %s50
      %s53 = sphi 0, %s51
      %s54 = sphi 0, %s52
      %s55 = sphi 0, %s53
      %s65 = sphi 0, %s67
      %s68 = sphi 0, %s65
      %s69 = sphi 0, %s68
      %s85 = sphi 0, %s69
      %s91 = sphi 0, %s93
      %s94 = sphi 0, %s91
      %s95 = sphi 0, %s94
      %s111 = sphi 0, %s95
      %s117 = sphi 0, %s119
      %s120 = sphi 0, %s117
      %s121 = sphi 0, %s120
      %s137 = sphi 0, %s121
      %s143 = sphi 0, %s145
      %s146 = sphi 0, %s143
      %s147 = sphi 0, %s146
      %s163 = sphi 0, %s147
      %s169 = sphi 0, %s171
      %s172 = sphi 0, %s169
      %s173 = sphi 0, %s172
      %s189 = sphi 0, %s173
      %s195 = sphi 0, %s197
      %s198 = sphi 0, %s195
      %s199 = sphi 0, %s198
      %s215 = sphi 0, %s199
      %s221 = sphi 0, %s223
      %s224 = sphi 0, %s221
      %s225 = sphi 0, %s224
      %s241 = sphi 0, %s225
      %s247 = sphi 0, %s249
      %s250 = sphi 0, %s247
      %s251 = sphi 0, %s250
      %s267 = sphi 0, %s251
      %s273 = sphi 0, %s275
      %s276 = sphi 0, %s273
      %s277 = sphi 0, %s276
      %s293 = sphi 0, %s277
      %s299 = sphi 0, %s301
      %s302 = sphi 0, %s299
      %s303 = sphi 0, %s302
      %s319 = sphi 0, %s303
      %s325 = sphi 0, %s327
      %s328 = sphi 0, %s325
      %s329 = sphi 0, %s328
      %s345 = sphi 0, %s329
      %s351 = sphi 0, %s353
      %s354 = sphi 0, %s351
      %s355 = sphi 0, %s354
      %s371 = sphi 0, %s355
      %s377 = sphi 0, %s379
      %s380 = sphi 0, %s377
      %s381 = sphi 0, %s380
      %s397 = sphi 0, %s381
      %s403 = sphi 0, %s405
      %s406 = sphi 0, %s403
      %s407 = sphi 0, %s406
      %s423 = sphi 0, %s407
      %s427 = sphi 0, %s427
      %s429 = sphi 0, %s427
      %s430 = sphi 0, %s429
      %s444 = sphi 0, %s430
      %s448 = sphi 0, %s448
      %s450 = sphi 0, %s448
      %s451 = sphi 0, %s450
      %s465 = sphi 0, %s451
      %s469 = sphi 0, %s469
      %s471 = sphi 0, %s469
      %s472 = sphi 0, %s471
      %s486 = sphi 0, %s472
      %s492 = sphi 0, %s494
      %s495 = sphi 0, %s492
      %s496 = sphi 0, %s495
      %s512 = sphi 0, %s496
      %s518 = sphi 0, %s520
      %s521 = sphi 0, %s518
      %s522 = sphi 0, %s521
      %s538 = sphi 0, %s522
    $region4: #{tpu_custom_call.1} parent=1 // loop_header_branch
      %46 = sbr.rel (%p44) target = $region8
    $region5: #{tpu_custom_call.1} parent=1 // loop_body
      %s48 = ssub.s32 %s43, 1
      %s49 = ssub.s32 %s43, 2
      %s56 = sadd.s32 1, %s51
      %p57 = scmp.ge.s32.totalorder %s56, 2
      %s58 = scalar_select %p57, 0, %s56
      %s59 = sadd.s32 1, %s50
      %s60 = scalar_select %p57, %s59, %s50
      %p61 = scmp.ge.s32.totalorder %s60, 2
      %s62 = scalar_select %p61, 0, %s60
      %s63 = ssub.s32 %s50, %s62
      %p64 = scmp.eq.s32.totalorder %s63, 0
      %s66 = sadd.s32 %s65, 1
      %s67 = scalar_select %p64, %s65, %s66
      %p70 = pneg %p64
      %p71 = scmp.eq.s32.totalorder %s43, 3
      %p72 = por %p70, %p71
      %p73 = scmp.ne.s32.totalorder %s65, %s68
      %p74 = scmp.eq.s32.totalorder %s43, 0
      %p75 = por %p73, %p74
      %p76 = scmp.ne.s32.totalorder %s65, %s68
      %p77 = scmp.eq.s32.totalorder %s48, 3
      %p78 = por %p76, %p77
      %p79 = scmp.ne.s32.totalorder %s68, %s69
      %p80 = scmp.eq.s32.totalorder %s48, 0
      %p81 = por %p79, %p80
      %p82 = scmp.ne.s32.totalorder %s68, %s69
      %p83 = scmp.eq.s32.totalorder %s49, 3
      %p84 = por %p82, %p83
      %p86 = scmp.ne.s32.totalorder %s69, %s85
      %p87 = scmp.eq.s32.totalorder %s49, 0
      %p88 = por %p86, %p87
      %s89 = ssub.s32 %s50, %s62
      %p90 = scmp.eq.s32.totalorder %s89, 0
      %s92 = sadd.s32 %s91, 1
      %s93 = scalar_select %p90, %s91, %s92
      %p96 = pneg %p90
      %p97 = scmp.eq.s32.totalorder %s43, 3
      %p98 = por %p96, %p97
      %p99 = scmp.ne.s32.totalorder %s91, %s94
      %p100 = scmp.eq.s32.totalorder %s43, 0
      %p101 = por %p99, %p100
      %p102 = scmp.ne.s32.totalorder %s91, %s94
      %p103 = scmp.eq.s32.totalorder %s48, 3
      %p104 = por %p102, %p103
      %p105 = scmp.ne.s32.totalorder %s94, %s95
      %p106 = scmp.eq.s32.totalorder %s48, 0
      %p107 = por %p105, %p106
      %p108 = scmp.ne.s32.totalorder %s94, %s95
      %p109 = scmp.eq.s32.totalorder %s49, 3
      %p110 = por %p108, %p109
      %p112 = scmp.ne.s32.totalorder %s95, %s111
      %p113 = scmp.eq.s32.totalorder %s49, 0
      %p114 = por %p112, %p113
      %s115 = ssub.s32 %s51, %s58
      %p116 = scmp.eq.s32.totalorder %s115, 0
      %s118 = sadd.s32 %s117, 1
      %s119 = scalar_select %p116, %s117, %s118
      %p122 = pneg %p116
      %p123 = scmp.eq.s32.totalorder %s43, 3
      %p124 = por %p122, %p123
      %p125 = scmp.ne.s32.totalorder %s117, %s120
      %p126 = scmp.eq.s32.totalorder %s43, 0
      %p127 = por %p125, %p126
      %p128 = scmp.ne.s32.totalorder %s117, %s120
      %p129 = scmp.eq.s32.totalorder %s48, 3
      %p130 = por %p128, %p129
      %p131 = scmp.ne.s32.totalorder %s120, %s121
      %p132 = scmp.eq.s32.totalorder %s48, 0
      %p133 = por %p131, %p132
      %p134 = scmp.ne.s32.totalorder %s120, %s121
      %p135 = scmp.eq.s32.totalorder %s49, 3
      %p136 = por %p134, %p135
      %p138 = scmp.ne.s32.totalorder %s121, %s137
      %p139 = scmp.eq.s32.totalorder %s49, 0
      %p140 = por %p138, %p139
      %s141 = ssub.s32 %s51, %s58
      %p142 = scmp.eq.s32.totalorder %s141, 0
      %s144 = sadd.s32 %s143, 1
      %s145 = scalar_select %p142, %s143, %s144
      %p148 = pneg %p142
      %p149 = scmp.eq.s32.totalorder %s43, 3
      %p150 = por %p148, %p149
      %p151 = scmp.ne.s32.totalorder %s143, %s146
      %p152 = scmp.eq.s32.totalorder %s43, 0
      %p153 = por %p151, %p152
      %p154 = scmp.ne.s32.totalorder %s143, %s146
      %p155 = scmp.eq.s32.totalorder %s48, 3
      %p156 = por %p154, %p155
      %p157 = scmp.ne.s32.totalorder %s146, %s147
      %p158 = scmp.eq.s32.totalorder %s48, 0
      %p159 = por %p157, %p158
      %p160 = scmp.ne.s32.totalorder %s146, %s147
      %p161 = scmp.eq.s32.totalorder %s49, 3
      %p162 = por %p160, %p161
      %p164 = scmp.ne.s32.totalorder %s147, %s163
      %p165 = scmp.eq.s32.totalorder %s49, 0
      %p166 = por %p164, %p165
      %s167 = ssub.s32 %s51, %s58
      %p168 = scmp.eq.s32.totalorder %s167, 0
      %s170 = sadd.s32 %s169, 1
      %s171 = scalar_select %p168, %s169, %s170
      %p174 = pneg %p168
      %p175 = scmp.eq.s32.totalorder %s43, 3
      %p176 = por %p174, %p175
      %p177 = scmp.ne.s32.totalorder %s169, %s172
      %p178 = scmp.eq.s32.totalorder %s43, 0
      %p179 = por %p177, %p178
      %p180 = scmp.ne.s32.totalorder %s169, %s172
      %p181 = scmp.eq.s32.totalorder %s48, 3
      %p182 = por %p180, %p181
      %p183 = scmp.ne.s32.totalorder %s172, %s173
      %p184 = scmp.eq.s32.totalorder %s48, 0
      %p185 = por %p183, %p184
      %p186 = scmp.ne.s32.totalorder %s172, %s173
      %p187 = scmp.eq.s32.totalorder %s49, 3
      %p188 = por %p186, %p187
      %p190 = scmp.ne.s32.totalorder %s173, %s189
      %p191 = scmp.eq.s32.totalorder %s49, 0
      %p192 = por %p190, %p191
      %s193 = ssub.s32 %s51, %s58
      %p194 = scmp.eq.s32.totalorder %s193, 0
      %s196 = sadd.s32 %s195, 1
      %s197 = scalar_select %p194, %s195, %s196
      %p200 = pneg %p194
      %p201 = scmp.eq.s32.totalorder %s43, 3
      %p202 = por %p200, %p201
      %p203 = scmp.ne.s32.totalorder %s195, %s198
      %p204 = scmp.eq.s32.totalorder %s43, 0
      %p205 = por %p203, %p204
      %p206 = scmp.ne.s32.totalorder %s195, %s198
      %p207 = scmp.eq.s32.totalorder %s48, 3
      %p208 = por %p206, %p207
      %p209 = scmp.ne.s32.totalorder %s198, %s199
      %p210 = scmp.eq.s32.totalorder %s48, 0
      %p211 = por %p209, %p210
      %p212 = scmp.ne.s32.totalorder %s198, %s199
      %p213 = scmp.eq.s32.totalorder %s49, 3
      %p214 = por %p212, %p213
      %p216 = scmp.ne.s32.totalorder %s199, %s215
      %p217 = scmp.eq.s32.totalorder %s49, 0
      %p218 = por %p216, %p217
      %s219 = ssub.s32 %s51, %s58
      %p220 = scmp.eq.s32.totalorder %s219, 0
      %s222 = sadd.s32 %s221, 1
      %s223 = scalar_select %p220, %s221, %s222
      %p226 = pneg %p220
      %p227 = scmp.eq.s32.totalorder %s43, 3
      %p228 = por %p226, %p227
      %p229 = scmp.ne.s32.totalorder %s221, %s224
      %p230 = scmp.eq.s32.totalorder %s43, 0
      %p231 = por %p229, %p230
      %p232 = scmp.ne.s32.totalorder %s221, %s224
      %p233 = scmp.eq.s32.totalorder %s48, 3
      %p234 = por %p232, %p233
      %p235 = scmp.ne.s32.totalorder %s224, %s225
      %p236 = scmp.eq.s32.totalorder %s48, 0
      %p237 = por %p235, %p236
      %p238 = scmp.ne.s32.totalorder %s224, %s225
      %p239 = scmp.eq.s32.totalorder %s49, 3
      %p240 = por %p238, %p239
      %p242 = scmp.ne.s32.totalorder %s225, %s241
      %p243 = scmp.eq.s32.totalorder %s49, 0
      %p244 = por %p242, %p243
      %s245 = ssub.s32 %s51, %s58
      %p246 = scmp.eq.s32.totalorder %s245, 0
      %s248 = sadd.s32 %s247, 1
      %s249 = scalar_select %p246, %s247, %s248
      %p252 = pneg %p246
      %p253 = scmp.eq.s32.totalorder %s43, 3
      %p254 = por %p252, %p253
      %p255 = scmp.ne.s32.totalorder %s247, %s250
      %p256 = scmp.eq.s32.totalorder %s43, 0
      %p257 = por %p255, %p256
      %p258 = scmp.ne.s32.totalorder %s247, %s250
      %p259 = scmp.eq.s32.totalorder %s48, 3
      %p260 = por %p258, %p259
      %p261 = scmp.ne.s32.totalorder %s250, %s251
      %p262 = scmp.eq.s32.totalorder %s48, 0
      %p263 = por %p261, %p262
      %p264 = scmp.ne.s32.totalorder %s250, %s251
      %p265 = scmp.eq.s32.totalorder %s49, 3
      %p266 = por %p264, %p265
      %p268 = scmp.ne.s32.totalorder %s251, %s267
      %p269 = scmp.eq.s32.totalorder %s49, 0
      %p270 = por %p268, %p269
      %s271 = ssub.s32 %s51, %s58
      %p272 = scmp.eq.s32.totalorder %s271, 0
      %s274 = sadd.s32 %s273, 1
      %s275 = scalar_select %p272, %s273, %s274
      %p278 = pneg %p272
      %p279 = scmp.eq.s32.totalorder %s43, 3
      %p280 = por %p278, %p279
      %p281 = scmp.ne.s32.totalorder %s273, %s276
      %p282 = scmp.eq.s32.totalorder %s43, 0
      %p283 = por %p281, %p282
      %p284 = scmp.ne.s32.totalorder %s273, %s276
      %p285 = scmp.eq.s32.totalorder %s48, 3
      %p286 = por %p284, %p285
      %p287 = scmp.ne.s32.totalorder %s276, %s277
      %p288 = scmp.eq.s32.totalorder %s48, 0
      %p289 = por %p287, %p288
      %p290 = scmp.ne.s32.totalorder %s276, %s277
      %p291 = scmp.eq.s32.totalorder %s49, 3
      %p292 = por %p290, %p291
      %p294 = scmp.ne.s32.totalorder %s277, %s293
      %p295 = scmp.eq.s32.totalorder %s49, 0
      %p296 = por %p294, %p295
      %s297 = ssub.s32 %s51, %s58
      %p298 = scmp.eq.s32.totalorder %s297, 0
      %s300 = sadd.s32 %s299, 1
      %s301 = scalar_select %p298, %s299, %s300
      %p304 = pneg %p298
      %p305 = scmp.eq.s32.totalorder %s43, 3
      %p306 = por %p304, %p305
      %p307 = scmp.ne.s32.totalorder %s299, %s302
      %p308 = scmp.eq.s32.totalorder %s43, 0
      %p309 = por %p307, %p308
      %p310 = scmp.ne.s32.totalorder %s299, %s302
      %p311 = scmp.eq.s32.totalorder %s48, 3
      %p312 = por %p310, %p311
      %p313 = scmp.ne.s32.totalorder %s302, %s303
      %p314 = scmp.eq.s32.totalorder %s48, 0
      %p315 = por %p313, %p314
      %p316 = scmp.ne.s32.totalorder %s302, %s303
      %p317 = scmp.eq.s32.totalorder %s49, 3
      %p318 = por %p316, %p317
      %p320 = scmp.ne.s32.totalorder %s303, %s319
      %p321 = scmp.eq.s32.totalorder %s49, 0
      %p322 = por %p320, %p321
      %s323 = ssub.s32 %s51, %s58
      %p324 = scmp.eq.s32.totalorder %s323, 0
      %s326 = sadd.s32 %s325, 1
      %s327 = scalar_select %p324, %s325, %s326
      %p330 = pneg %p324
      %p331 = scmp.eq.s32.totalorder %s43, 3
      %p332 = por %p330, %p331
      %p333 = scmp.ne.s32.totalorder %s325, %s328
      %p334 = scmp.eq.s32.totalorder %s43, 0
      %p335 = por %p333, %p334
      %p336 = scmp.ne.s32.totalorder %s325, %s328
      %p337 = scmp.eq.s32.totalorder %s48, 3
      %p338 = por %p336, %p337
      %p339 = scmp.ne.s32.totalorder %s328, %s329
      %p340 = scmp.eq.s32.totalorder %s48, 0
      %p341 = por %p339, %p340
      %p342 = scmp.ne.s32.totalorder %s328, %s329
      %p343 = scmp.eq.s32.totalorder %s49, 3
      %p344 = por %p342, %p343
      %p346 = scmp.ne.s32.totalorder %s329, %s345
      %p347 = scmp.eq.s32.totalorder %s49, 0
      %p348 = por %p346, %p347
      %s349 = ssub.s32 %s51, %s58
      %p350 = scmp.eq.s32.totalorder %s349, 0
      %s352 = sadd.s32 %s351, 1
      %s353 = scalar_select %p350, %s351, %s352
      %p356 = pneg %p350
      %p357 = scmp.eq.s32.totalorder %s43, 3
      %p358 = por %p356, %p357
      %p359 = scmp.ne.s32.totalorder %s351, %s354
      %p360 = scmp.eq.s32.totalorder %s43, 0
      %p361 = por %p359, %p360
      %p362 = scmp.ne.s32.totalorder %s351, %s354
      %p363 = scmp.eq.s32.totalorder %s48, 3
      %p364 = por %p362, %p363
      %p365 = scmp.ne.s32.totalorder %s354, %s355
      %p366 = scmp.eq.s32.totalorder %s48, 0
      %p367 = por %p365, %p366
      %p368 = scmp.ne.s32.totalorder %s354, %s355
      %p369 = scmp.eq.s32.totalorder %s49, 3
      %p370 = por %p368, %p369
      %p372 = scmp.ne.s32.totalorder %s355, %s371
      %p373 = scmp.eq.s32.totalorder %s49, 0
      %p374 = por %p372, %p373
      %s375 = ssub.s32 %s51, %s58
      %p376 = scmp.eq.s32.totalorder %s375, 0
      %s378 = sadd.s32 %s377, 1
      %s379 = scalar_select %p376, %s377, %s378
      %p382 = pneg %p376
      %p383 = scmp.eq.s32.totalorder %s43, 3
      %p384 = por %p382, %p383
      %p385 = scmp.ne.s32.totalorder %s377, %s380
      %p386 = scmp.eq.s32.totalorder %s43, 0
      %p387 = por %p385, %p386
      %p388 = scmp.ne.s32.totalorder %s377, %s380
      %p389 = scmp.eq.s32.totalorder %s48, 3
      %p390 = por %p388, %p389
      %p391 = scmp.ne.s32.totalorder %s380, %s381
      %p392 = scmp.eq.s32.totalorder %s48, 0
      %p393 = por %p391, %p392
      %p394 = scmp.ne.s32.totalorder %s380, %s381
      %p395 = scmp.eq.s32.totalorder %s49, 3
      %p396 = por %p394, %p395
      %p398 = scmp.ne.s32.totalorder %s381, %s397
      %p399 = scmp.eq.s32.totalorder %s49, 0
      %p400 = por %p398, %p399
      %s401 = ssub.s32 %s51, %s58
      %p402 = scmp.eq.s32.totalorder %s401, 0
      %s404 = sadd.s32 %s403, 1
      %s405 = scalar_select %p402, %s403, %s404
      %p408 = pneg %p402
      %p409 = scmp.eq.s32.totalorder %s43, 3
      %p410 = por %p408, %p409
      %p411 = scmp.ne.s32.totalorder %s403, %s406
      %p412 = scmp.eq.s32.totalorder %s43, 0
      %p413 = por %p411, %p412
      %p414 = scmp.ne.s32.totalorder %s403, %s406
      %p415 = scmp.eq.s32.totalorder %s48, 3
      %p416 = por %p414, %p415
      %p417 = scmp.ne.s32.totalorder %s406, %s407
      %p418 = scmp.eq.s32.totalorder %s48, 0
      %p419 = por %p417, %p418
      %p420 = scmp.ne.s32.totalorder %s406, %s407
      %p421 = scmp.eq.s32.totalorder %s49, 3
      %p422 = por %p420, %p421
      %p424 = scmp.ne.s32.totalorder %s407, %s423
      %p425 = scmp.eq.s32.totalorder %s49, 0
      %p426 = por %p424, %p425
      %s428 = sadd.s32 %s427, 1
      %p431 = scmp.eq.s32.totalorder %s43, 3
      %p432 = scmp.ne.s32.totalorder %s427, %s429
      %p433 = scmp.eq.s32.totalorder %s43, 0
      %p434 = por %p432, %p433
      %p435 = scmp.ne.s32.totalorder %s427, %s429
      %p436 = scmp.eq.s32.totalorder %s48, 3
      %p437 = por %p435, %p436
      %p438 = scmp.ne.s32.totalorder %s429, %s430
      %p439 = scmp.eq.s32.totalorder %s48, 0
      %p440 = por %p438, %p439
      %p441 = scmp.ne.s32.totalorder %s429, %s430
      %p442 = scmp.eq.s32.totalorder %s49, 3
      %p443 = por %p441, %p442
      %p445 = scmp.ne.s32.totalorder %s430, %s444
      %p446 = scmp.eq.s32.totalorder %s49, 0
      %p447 = por %p445, %p446
      %s449 = sadd.s32 %s448, 1
      %p452 = scmp.eq.s32.totalorder %s43, 3
      %p453 = scmp.ne.s32.totalorder %s448, %s450
      %p454 = scmp.eq.s32.totalorder %s43, 0
      %p455 = por %p453, %p454
      %p456 = scmp.ne.s32.totalorder %s448, %s450
      %p457 = scmp.eq.s32.totalorder %s48, 3
      %p458 = por %p456, %p457
      %p459 = scmp.ne.s32.totalorder %s450, %s451
      %p460 = scmp.eq.s32.totalorder %s48, 0
      %p461 = por %p459, %p460
      %p462 = scmp.ne.s32.totalorder %s450, %s451
      %p463 = scmp.eq.s32.totalorder %s49, 3
      %p464 = por %p462, %p463
      %p466 = scmp.ne.s32.totalorder %s451, %s465
      %p467 = scmp.eq.s32.totalorder %s49, 0
      %p468 = por %p466, %p467
      %s470 = sadd.s32 %s469, 1
      %p473 = scmp.eq.s32.totalorder %s43, 3
      %p474 = scmp.ne.s32.totalorder %s469, %s471
      %p475 = scmp.eq.s32.totalorder %s43, 0
      %p476 = por %p474, %p475
      %p477 = scmp.ne.s32.totalorder %s469, %s471
      %p478 = scmp.eq.s32.totalorder %s48, 3
      %p479 = por %p477, %p478
      %p480 = scmp.ne.s32.totalorder %s471, %s472
      %p481 = scmp.eq.s32.totalorder %s48, 0
      %p482 = por %p480, %p481
      %p483 = scmp.ne.s32.totalorder %s471, %s472
      %p484 = scmp.eq.s32.totalorder %s49, 3
      %p485 = por %p483, %p484
      %p487 = scmp.ne.s32.totalorder %s472, %s486
      %p488 = scmp.eq.s32.totalorder %s49, 0
      %p489 = por %p487, %p488
      %s490 = ssub.s32 %s50, %s62
      %p491 = scmp.eq.s32.totalorder %s490, 0
      %s493 = sadd.s32 %s492, 1
      %s494 = scalar_select %p491, %s492, %s493
      %p497 = pneg %p491
      %p498 = scmp.eq.s32.totalorder %s43, 3
      %p499 = por %p497, %p498
      %p500 = scmp.ne.s32.totalorder %s492, %s495
      %p501 = scmp.eq.s32.totalorder %s43, 0
      %p502 = por %p500, %p501
      %p503 = scmp.ne.s32.totalorder %s492, %s495
      %p504 = scmp.eq.s32.totalorder %s48, 3
      %p505 = por %p503, %p504
      %p506 = scmp.ne.s32.totalorder %s495, %s496
      %p507 = scmp.eq.s32.totalorder %s48, 0
      %p508 = por %p506, %p507
      %p509 = scmp.ne.s32.totalorder %s495, %s496
      %p510 = scmp.eq.s32.totalorder %s49, 3
      %p511 = por %p509, %p510
      %p513 = scmp.ne.s32.totalorder %s496, %s512
      %p514 = scmp.eq.s32.totalorder %s49, 0
      %p515 = por %p513, %p514
      %s516 = ssub.s32 %s50, %s62
      %p517 = scmp.eq.s32.totalorder %s516, 0
      %s519 = sadd.s32 %s518, 1
      %s520 = scalar_select %p517, %s518, %s519
      %p523 = pneg %p517
      %p524 = scmp.eq.s32.totalorder %s43, 3
      %p525 = por %p523, %p524
      %p526 = scmp.ne.s32.totalorder %s518, %s521
      %p527 = scmp.eq.s32.totalorder %s43, 0
      %p528 = por %p526, %p527
      %p529 = scmp.ne.s32.totalorder %s518, %s521
      %p530 = scmp.eq.s32.totalorder %s48, 3
      %p531 = por %p529, %p530
      %p532 = scmp.ne.s32.totalorder %s521, %s522
      %p533 = scmp.eq.s32.totalorder %s48, 0
      %p534 = por %p532, %p533
      %p535 = scmp.ne.s32.totalorder %s521, %s522
      %p536 = scmp.eq.s32.totalorder %s49, 3
      %p537 = por %p535, %p536
      %p539 = scmp.ne.s32.totalorder %s522, %s538
      %p540 = scmp.eq.s32.totalorder %s49, 0
      %p541 = por %p539, %p540
      %p542 = scmp.le.s32.totalorder 1, %s43
      %p543 = scmp.lt.s32.totalorder %s43, 5
      %p544 = pnand %p542, %p543
      %p545 = pneg %p544
      // Predicated region
      $region9: #{tpu_custom_call.1} parent=5 // pred_check
        _
      $region10: #{tpu_custom_call.1} parent=5 // pred_check_branch
        %547 = sbr.rel (%p544) target = $region12
      $region11: #{tpu_custom_call.1} parent=5 // pred_region
        %s548 = ssub.s32 %s43, 1
        // Predicated region
        $region13: #{tpu_custom_call.1} parent=11 // pred_check
          %p549 = pneg %p440
        $region14: #{tpu_custom_call.1} parent=11 // pred_check_branch
          %551 = sbr.rel (%p549) target = $region16
        $region15: #{tpu_custom_call.1} parent=11 // pred_region
          _
        $region16: #{tpu_custom_call.1} parent=11 // pred_fallthru
          _
        // Predicated region
        $region17: #{tpu_custom_call.1} parent=11 // pred_check
          %p552 = pneg %p461
        $region18: #{tpu_custom_call.1} parent=11 // pred_check_branch
          %554 = sbr.rel (%p552) target = $region20
        $region19: #{tpu_custom_call.1} parent=11 // pred_region
          _
        $region20: #{tpu_custom_call.1} parent=11 // pred_fallthru
          _
        // Predicated region
        $region21: #{tpu_custom_call.1} parent=11 // pred_check
          %p555 = pneg %p482
        $region22: #{tpu_custom_call.1} parent=11 // pred_check_branch
          %557 = sbr.rel (%p555) target = $region24
        $region23: #{tpu_custom_call.1} parent=11 // pred_region
          _
        $region24: #{tpu_custom_call.1} parent=11 // pred_fallthru
          _
      $region12: #{tpu_custom_call.1} parent=5 // pred_fallthru
        _
      %p558 = scmp.lt.s32.totalorder %s43, 4
      // Predicated region
      $region25: #{tpu_custom_call.1} parent=5 // pred_check
        %p559 = pneg %p558
      $region26: #{tpu_custom_call.1} parent=5 // pred_check_branch
        %561 = sbr.rel (%p559) target = $region28
      $region27: #{tpu_custom_call.1} parent=5 // pred_region
        // Predicated region
        $region29: #{tpu_custom_call.1} parent=27 // pred_check
          %p562 = pneg %p75
        $region30: #{tpu_custom_call.1} parent=27 // pred_check_branch
          %564 = sbr.rel (%p562) target = $region32
        $region31: #{tpu_custom_call.1} parent=27 // pred_region
          %p565 = scmp.lt.s32.totalorder %s50, 1
          %s566 = scalar_select %p565, %s50, 1
          %s567 = smul.addr %s566, 8
          %s568 = scalar_lea.vmem %s0, %s567
        $region32: #{tpu_custom_call.1} parent=27 // pred_fallthru
          _
        // Predicated region
        $region33: #{tpu_custom_call.1} parent=27 // pred_check
          %p569 = pneg %p101
        $region34: #{tpu_custom_call.1} parent=27 // pred_check_branch
          %571 = sbr.rel (%p569) target = $region36
        $region35: #{tpu_custom_call.1} parent=27 // pred_region
          %p572 = scmp.lt.s32.totalorder %s50, 1
          %s573 = scalar_select %p572, %s50, 1
          %s574 = smul.addr %s573, 8
          %s575 = scalar_lea.vmem %s1, %s574
        $region36: #{tpu_custom_call.1} parent=27 // pred_fallthru
          _
        // Predicated region
        $region37: #{tpu_custom_call.1} parent=27 // pred_check
          %p576 = pneg %p127
        $region38: #{tpu_custom_call.1} parent=27 // pred_check_branch
          %578 = sbr.rel (%p576) target = $region40
        $region39: #{tpu_custom_call.1} parent=27 // pred_region
          %p579 = scmp.lt.s32.totalorder %s51, 1
          %s580 = scalar_select %p579, %s51, 1
          %s581 = smul.addr %s580, 4
          %s582 = smul.addr %s581, 4
          %s583 = scalar_lea.vmem %s2, %s582
        $region40: #{tpu_custom_call.1} parent=27 // pred_fallthru
          _
        // Predicated region
        $region41: #{tpu_custom_call.1} parent=27 // pred_check
          %p584 = pneg %p153
        $region42: #{tpu_custom_call.1} parent=27 // pred_check_branch
          %586 = sbr.rel (%p584) target = $region44
        $region43: #{tpu_custom_call.1} parent=27 // pred_region
          %p587 = scmp.lt.s32.totalorder %s51, 1
          %s588 = scalar_select %p587, %s51, 1
          %s589 = scalar_lea.vmem %s3, %s588
        $region44: #{tpu_custom_call.1} parent=27 // pred_fallthru
          _
        // Predicated region
        $region45: #{tpu_custom_call.1} parent=27 // pred_check
          %p590 = pneg %p179
        $region46: #{tpu_custom_call.1} parent=27 // pred_check_branch
          %592 = sbr.rel (%p590) target = $region48
        $region47: #{tpu_custom_call.1} parent=27 // pred_region
          %p593 = scmp.lt.s32.totalorder %s51, 1
          %s594 = scalar_select %p593, %s51, 1
          %s595 = smul.addr %s594, 4
          %s596 = smul.addr %s595, 4
          %s597 = scalar_lea.vmem %s4, %s596
        $region48: #{tpu_custom_call.1} parent=27 // pred_fallthru
          _
        // Predicated region
        $region49: #{tpu_custom_call.1} parent=27 // pred_check
          %p598 = pneg %p205
        $region50: #{tpu_custom_call.1} parent=27 // pred_check_branch
          %600 = sbr.rel (%p598) target = $region52
        $region51: #{tpu_custom_call.1} parent=27 // pred_region
          %s601 = sand.u32 %s195, 1
          %s602 = scalar_lea.sflag [#allocation4], %s601
          %s603 = sand.u32 %s195, 1
          %s604 = scalar_lea.vmem [#allocation3], %s603
          %s606 = ssub.s32 16, 16
          %607 = vsyncadd %s602, %s606
          %s608 = smul.addr %s51, 16
          %s609 = scalar_lea.hbm %s5, %s608
          %s611 = sshll.u32 %s604, 4
          %s612 = int_to_ptr.vmem [resolvable:$true] %s611
          %614 = dma.hbm_to_vmem [thread:$0]  %s609, 16, %s612, %s602
        $region52: #{tpu_custom_call.1} parent=27 // pred_fallthru
          _
        // Predicated region
        $region53: #{tpu_custom_call.1} parent=27 // pred_check
          %p615 = pneg %p231
        $region54: #{tpu_custom_call.1} parent=27 // pred_check_branch
          %617 = sbr.rel (%p615) target = $region56
        $region55: #{tpu_custom_call.1} parent=27 // pred_region
          %s618 = sand.u32 %s43, 1
          %s619 = scalar_lea.sflag [#allocation7], %s618
          %s620 = sand.u32 %s221, 1
          %s621 = scalar_lea.vmem [#allocation6], %s620
          %s623 = ssub.s32 16, 16
          %624 = vsyncadd %s619, %s623
          %s625 = smul.addr %s51, 16
          %s626 = scalar_lea.hbm %s6, %s625
          %s628 = sshll.u32 %s621, 4
          %s629 = int_to_ptr.vmem [resolvable:$true] %s628
          %631 = dma.hbm_to_vmem [thread:$0]  %s626, 16, %s629, %s619
        $region56: #{tpu_custom_call.1} parent=27 // pred_fallthru
          _
        // Predicated region
        $region57: #{tpu_custom_call.1} parent=27 // pred_check
          %p632 = pneg %p257
        $region58: #{tpu_custom_call.1} parent=27 // pred_check_branch
          %634 = sbr.rel (%p632) target = $region60
        $region59: #{tpu_custom_call.1} parent=27 // pred_region
          %s635 = sand.u32 %s43, 1
          %s636 = scalar_lea.sflag [#allocation7], %s635
          %s637 = sand.u32 %s247, 1
          %s638 = scalar_lea.vmem [#allocation8], %s637
          %s640 = ssub.s32 16, 16
          %641 = vsyncadd %s636, %s640
          %s642 = smul.addr %s51, 16
          %s643 = scalar_lea.hbm %s7, %s642
          %s645 = sshll.u32 %s638, 4
          %s646 = int_to_ptr.vmem [resolvable:$true] %s645
          %648 = dma.hbm_to_vmem [thread:$0]  %s643, 16, %s646, %s636
        $region60: #{tpu_custom_call.1} parent=27 // pred_fallthru
          _
        // Predicated region
        $region61: #{tpu_custom_call.1} parent=27 // pred_check
          %p649 = pneg %p283
        $region62: #{tpu_custom_call.1} parent=27 // pred_check_branch
          %651 = sbr.rel (%p649) target = $region64
        $region63: #{tpu_custom_call.1} parent=27 // pred_region
          %p652 = scmp.lt.s32.totalorder %s51, 1
          %s653 = scalar_select %p652, %s51, 1
          %s654 = smul.addr %s653, 4
          %s655 = smul.addr %s654, 4
          %s656 = scalar_lea.vmem %s8, %s655
        $region64: #{tpu_custom_call.1} parent=27 // pred_fallthru
          _
        // Predicated region
        $region65: #{tpu_custom_call.1} parent=27 // pred_check
          %p657 = pneg %p309
        $region66: #{tpu_custom_call.1} parent=27 // pred_check_branch
          %659 = sbr.rel (%p657) target = $region68
        $region67: #{tpu_custom_call.1} parent=27 // pred_region
          %s660 = sand.u32 %s43, 1
          %s661 = scalar_lea.sflag [#allocation10], %s660
          %s662 = sand.u32 %s299, 1
          %s663 = scalar_lea.vmem [#allocation9], %s662
          %s665 = ssub.s32 16, 16
          %666 = vsyncadd %s661, %s665
          %s667 = smul.addr %s51, 16
          %s668 = scalar_lea.hbm %s9, %s667
          %s670 = sshll.u32 %s663, 4
          %s671 = int_to_ptr.vmem [resolvable:$true] %s670
          %673 = dma.hbm_to_vmem [thread:$0]  %s668, 16, %s671, %s661
        $region68: #{tpu_custom_call.1} parent=27 // pred_fallthru
          _
        // Predicated region
        $region69: #{tpu_custom_call.1} parent=27 // pred_check
          %p674 = pneg %p335
        $region70: #{tpu_custom_call.1} parent=27 // pred_check_branch
          %676 = sbr.rel (%p674) target = $region72
        $region71: #{tpu_custom_call.1} parent=27 // pred_region
          %p677 = scmp.lt.s32.totalorder %s51, 1
          %s678 = scalar_select %p677, %s51, 1
          %s679 = smul.addr %s678, 16
          %s680 = smul.addr %s679, 4
          %s681 = scalar_lea.vmem %s10, %s680
        $region72: #{tpu_custom_call.1} parent=27 // pred_fallthru
          _
        // Predicated region
        $region73: #{tpu_custom_call.1} parent=27 // pred_check
          %p682 = pneg %p361
        $region74: #{tpu_custom_call.1} parent=27 // pred_check_branch
          %684 = sbr.rel (%p682) target = $region76
        $region75: #{tpu_custom_call.1} parent=27 // pred_region
          %s685 = sand.u32 %s43, 1
          %s686 = scalar_lea.sflag [#allocation10], %s685
          %s687 = sand.u32 %s351, 1
          %s688 = scalar_lea.vmem [#allocation11], %s687
          %s690 = ssub.s32 16, 16
          %691 = vsyncadd %s686, %s690
          %s692 = smul.addr %s51, 16
          %s693 = scalar_lea.hbm %s11, %s692
          %s695 = sshll.u32 %s688, 4
          %s696 = int_to_ptr.vmem [resolvable:$true] %s695
          %698 = dma.hbm_to_vmem [thread:$0]  %s693, 16, %s696, %s686
        $region76: #{tpu_custom_call.1} parent=27 // pred_fallthru
          _
        // Predicated region
        $region77: #{tpu_custom_call.1} parent=27 // pred_check
          %p699 = pneg %p387
        $region78: #{tpu_custom_call.1} parent=27 // pred_check_branch
          %701 = sbr.rel (%p699) target = $region80
        $region79: #{tpu_custom_call.1} parent=27 // pred_region
          %s702 = sand.u32 %s43, 1
          %s703 = scalar_lea.sflag [#allocation13], %s702
          %s704 = sand.u32 %s377, 1
          %s705 = scalar_lea.vmem [#allocation12], %s704
          %s707 = ssub.s32 16, 16
          %708 = vsyncadd %s703, %s707
          %s709 = smul.addr %s51, 16
          %s710 = scalar_lea.hbm %s12, %s709
          %s712 = sshll.u32 %s705, 4
          %s713 = int_to_ptr.vmem [resolvable:$true] %s712
          %715 = dma.hbm_to_vmem [thread:$0]  %s710, 16, %s713, %s703
        $region80: #{tpu_custom_call.1} parent=27 // pred_fallthru
          _
        // Predicated region
        $region81: #{tpu_custom_call.1} parent=27 // pred_check
          %p716 = pneg %p413
        $region82: #{tpu_custom_call.1} parent=27 // pred_check_branch
          %718 = sbr.rel (%p716) target = $region84
        $region83: #{tpu_custom_call.1} parent=27 // pred_region
          %s719 = sand.u32 %s43, 1
          %s720 = scalar_lea.sflag [#allocation13], %s719
          %s721 = sand.u32 %s403, 1
          %s722 = scalar_lea.vmem [#allocation14], %s721
          %s724 = ssub.s32 16, 16
          %725 = vsyncadd %s720, %s724
          %s726 = smul.addr %s51, 16
          %s727 = scalar_lea.hbm %s13, %s726
          %s729 = sshll.u32 %s722, 4
          %s730 = int_to_ptr.vmem [resolvable:$true] %s729
          %732 = dma.hbm_to_vmem [thread:$0]  %s727, 16, %s730, %s720
        $region84: #{tpu_custom_call.1} parent=27 // pred_fallthru
          _
      $region28: #{tpu_custom_call.1} parent=5 // pred_fallthru
        _
      %p733 = scmp.le.s32.totalorder 1, %s43
      %p734 = scmp.lt.s32.totalorder %s43, 5
      %p735 = pnand %p733, %p734
      %p736 = pneg %p735
      // Predicated region
      $region85: #{tpu_custom_call.1} parent=5 // pred_check
        _
      $region86: #{tpu_custom_call.1} parent=5 // pred_check_branch
        %738 = sbr.rel (%p735) target = $region88
      $region87: #{tpu_custom_call.1} parent=5 // pred_region
        %s739 = ssub.s32 %s43, 1
        %s740 = sand.u32 %s198, 1
        %s741 = scalar_lea.sflag [#allocation4], %s740
        %s742 = sand.u32 %s198, 1
        %s743 = scalar_lea.vmem [#allocation3], %s742
        // Predicated region
        $region89: #{tpu_custom_call.1} parent=87 // pred_check
          %p744 = pneg %p211
        $region90: #{tpu_custom_call.1} parent=87 // pred_check_branch
          %746 = sbr.rel (%p744) target = $region92
        $region91: #{tpu_custom_call.1} parent=87 // pred_region
          %747 = dma.done %s741, 16
        $region92: #{tpu_custom_call.1} parent=87 // pred_fallthru
          _
        %s748 = sand.u32 %s48, 1
        %s749 = scalar_lea.sflag [#allocation7], %s748
        %s750 = sand.u32 %s224, 1
        %s751 = scalar_lea.vmem [#allocation6], %s750
        // Predicated region
        $region93: #{tpu_custom_call.1} parent=87 // pred_check
          %p752 = pneg %p237
        $region94: #{tpu_custom_call.1} parent=87 // pred_check_branch
          %754 = sbr.rel (%p752) target = $region96
        $region95: #{tpu_custom_call.1} parent=87 // pred_region
          %755 = dma.done %s749, 16
        $region96: #{tpu_custom_call.1} parent=87 // pred_fallthru
          _
        %s756 = sand.u32 %s48, 1
        %s757 = scalar_lea.sflag [#allocation7], %s756
        %s758 = sand.u32 %s250, 1
        %s759 = scalar_lea.vmem [#allocation8], %s758
        // Predicated region
        $region97: #{tpu_custom_call.1} parent=87 // pred_check
          %p760 = pneg %p263
        $region98: #{tpu_custom_call.1} parent=87 // pred_check_branch
          %762 = sbr.rel (%p760) target = $region100
        $region99: #{tpu_custom_call.1} parent=87 // pred_region
          %763 = dma.done %s757, 16
        $region100: #{tpu_custom_call.1} parent=87 // pred_fallthru
          _
        %s764 = sand.u32 %s48, 1
        %s765 = scalar_lea.sflag [#allocation10], %s764
        %s766 = sand.u32 %s302, 1
        %s767 = scalar_lea.vmem [#allocation9], %s766
        // Predicated region
        $region101: #{tpu_custom_call.1} parent=87 // pred_check
          %p768 = pneg %p315
        $region102: #{tpu_custom_call.1} parent=87 // pred_check_branch
          %770 = sbr.rel (%p768) target = $region104
        $region103: #{tpu_custom_call.1} parent=87 // pred_region
          %771 = dma.done %s765, 16
        $region104: #{tpu_custom_call.1} parent=87 // pred_fallthru
          _
        %s772 = sand.u32 %s48, 1
        %s773 = scalar_lea.sflag [#allocation10], %s772
        %s774 = sand.u32 %s354, 1
        %s775 = scalar_lea.vmem [#allocation11], %s774
        // Predicated region
        $region105: #{tpu_custom_call.1} parent=87 // pred_check
          %p776 = pneg %p367
        $region106: #{tpu_custom_call.1} parent=87 // pred_check_branch
          %778 = sbr.rel (%p776) target = $region108
        $region107: #{tpu_custom_call.1} parent=87 // pred_region
          %779 = dma.done %s773, 16
        $region108: #{tpu_custom_call.1} parent=87 // pred_fallthru
          _
        %s780 = sand.u32 %s48, 1
        %s781 = scalar_lea.sflag [#allocation13], %s780
        %s782 = sand.u32 %s380, 1
        %s783 = scalar_lea.vmem [#allocation12], %s782
        // Predicated region
        $region109: #{tpu_custom_call.1} parent=87 // pred_check
          %p784 = pneg %p393
        $region110: #{tpu_custom_call.1} parent=87 // pred_check_branch
          %786 = sbr.rel (%p784) target = $region112
        $region111: #{tpu_custom_call.1} parent=87 // pred_region
          %787 = dma.done %s781, 16
        $region112: #{tpu_custom_call.1} parent=87 // pred_fallthru
          _
        %s788 = sand.u32 %s48, 1
        %s789 = scalar_lea.sflag [#allocation13], %s788
        %s790 = sand.u32 %s406, 1
        %s791 = scalar_lea.vmem [#allocation14], %s790
        // Predicated region
        $region113: #{tpu_custom_call.1} parent=87 // pred_check
          %p792 = pneg %p419
        $region114: #{tpu_custom_call.1} parent=87 // pred_check_branch
          %794 = sbr.rel (%p792) target = $region116
        $region115: #{tpu_custom_call.1} parent=87 // pred_region
          %795 = dma.done %s789, 16
        $region116: #{tpu_custom_call.1} parent=87 // pred_fallthru
          _
        %p796 = scmp.lt.s32.totalorder %s52, 1
        %s797 = scalar_select %p796, %s52, 1
        %s798 = smul.addr %s797, 8
        %s799 = scalar_lea.vmem %s0, %s798
        %p800 = pneg %p81
        %p801 = pneg %p78
        %p802 = scmp.lt.s32.totalorder %s52, 1
        %s803 = scalar_select %p802, %s52, 1
        %s804 = smul.addr %s803, 8
        %s805 = scalar_lea.vmem %s1, %s804
        %p806 = pneg %p107
        %p807 = pneg %p104
        %p808 = scmp.lt.s32.totalorder %s53, 1
        %s809 = scalar_select %p808, %s53, 1
        %s810 = smul.addr %s809, 4
        %s811 = smul.addr %s810, 4
        %s812 = scalar_lea.vmem %s2, %s811
        %p813 = pneg %p133
        %p814 = pneg %p130
        %p815 = scmp.lt.s32.totalorder %s53, 1
        %s816 = scalar_select %p815, %s53, 1
        %s817 = scalar_lea.vmem %s3, %s816
        %p818 = pneg %p159
        %p819 = pneg %p156
        %p820 = scmp.lt.s32.totalorder %s53, 1
        %s821 = scalar_select %p820, %s53, 1
        %s822 = smul.addr %s821, 4
        %s823 = smul.addr %s822, 4
        %s824 = scalar_lea.vmem %s4, %s823
        %p825 = pneg %p185
        %p826 = pneg %p182
        %s827 = sand.u32 %s198, 1
        %s828 = scalar_lea.sflag [#allocation4], %s827
        %s829 = sand.u32 %s198, 1
        %s830 = scalar_lea.vmem [#allocation3], %s829
        %p831 = pneg %p211
        %p832 = pneg %p208
        %s833 = sand.u32 %s48, 1
        %s834 = scalar_lea.sflag [#allocation7], %s833
        %s835 = sand.u32 %s224, 1
        %s836 = scalar_lea.vmem [#allocation6], %s835
        %p837 = pneg %p237
        %p838 = pneg %p234
        %s839 = sand.u32 %s48, 1
        %s840 = scalar_lea.sflag [#allocation7], %s839
        %s841 = sand.u32 %s250, 1
        %s842 = scalar_lea.vmem [#allocation8], %s841
        %p843 = pneg %p263
        %p844 = pneg %p260
        %p845 = scmp.lt.s32.totalorder %s53, 1
        %s846 = scalar_select %p845, %s53, 1
        %s847 = smul.addr %s846, 4
        %s848 = smul.addr %s847, 4
        %s849 = scalar_lea.vmem %s8, %s848
        %p850 = pneg %p289
        %p851 = pneg %p286
        %s852 = sand.u32 %s48, 1
        %s853 = scalar_lea.sflag [#allocation10], %s852
        %s854 = sand.u32 %s302, 1
        %s855 = scalar_lea.vmem [#allocation9], %s854
        %p856 = pneg %p315
        %p857 = pneg %p312
        %p858 = scmp.lt.s32.totalorder %s53, 1
        %s859 = scalar_select %p858, %s53, 1
        %s860 = smul.addr %s859, 16
        %s861 = smul.addr %s860, 4
        %s862 = scalar_lea.vmem %s10, %s861
        %p863 = pneg %p341
        %p864 = pneg %p338
        %s865 = sand.u32 %s48, 1
        %s866 = scalar_lea.sflag [#allocation10], %s865
        %s867 = sand.u32 %s354, 1
        %s868 = scalar_lea.vmem [#allocation11], %s867
        %p869 = pneg %p367
        %p870 = pneg %p364
        %s871 = sand.u32 %s48, 1
        %s872 = scalar_lea.sflag [#allocation13], %s871
        %s873 = sand.u32 %s380, 1
        %s874 = scalar_lea.vmem [#allocation12], %s873
        %p875 = pneg %p393
        %p876 = pneg %p390
        %s877 = sand.u32 %s48, 1
        %s878 = scalar_lea.sflag [#allocation13], %s877
        %s879 = sand.u32 %s406, 1
        %s880 = scalar_lea.vmem [#allocation14], %s879
        %p881 = pneg %p419
        %p882 = pneg %p416
        %p883 = pneg %p440
        %p884 = pneg %p437
        %p885 = pneg %p461
        %p886 = pneg %p458
        %p887 = pneg %p482
        %p888 = pneg %p479
        %p889 = pneg %p508
        %p890 = pneg %p505
        %s891 = sand.u32 %s495, 1
        %s892 = scalar_lea.sflag [#allocation5], %s891
        %s893 = sand.u32 %s495, 1
        %s894 = scalar_lea.vmem [#allocation15], %s893
        %p895 = pneg %p534
        %p896 = pneg %p531
        %s897 = sand.u32 %s521, 1
        %s898 = scalar_lea.sflag [#allocation17], %s897
        %s899 = sand.u32 %s521, 1
        %s900 = scalar_lea.vmem [#allocation16], %s899
        %p901 = scmp.lt.s32.totalorder %s52, 1
        %s902 = scalar_select %p901, %s52, 1
        %s903 = smul.addr %s902, 8
        %s904 = scalar_lea.vmem %s0, %s903
        %p905 = scmp.lt.s32.totalorder %s52, 1
        %s906 = scalar_select %p905, %s52, 1
        %s907 = smul.addr %s906, 8
        %s908 = scalar_lea.vmem %s1, %s907
        %p909 = scmp.lt.s32.totalorder %s53, 1
        %s910 = scalar_select %p909, %s53, 1
        %s911 = smul.addr %s910, 4
        %s912 = smul.addr %s911, 4
        %s913 = scalar_lea.vmem %s2, %s912
        %p914 = scmp.lt.s32.totalorder %s53, 1
        %s915 = scalar_select %p914, %s53, 1
        %s916 = scalar_lea.vmem %s3, %s915
        %p917 = scmp.lt.s32.totalorder %s53, 1
        %s918 = scalar_select %p917, %s53, 1
        %s919 = smul.addr %s918, 4
        %s920 = smul.addr %s919, 4
        %s921 = scalar_lea.vmem %s4, %s920
        %p922 = scmp.lt.s32.totalorder %s53, 1
        %s923 = scalar_select %p922, %s53, 1
        %s924 = smul.addr %s923, 4
        %s925 = smul.addr %s924, 4
        %s926 = scalar_lea.vmem %s8, %s925
        %p927 = scmp.lt.s32.totalorder %s53, 1
        %s928 = scalar_select %p927, %s53, 1
        %s929 = smul.addr %s928, 16
        %s930 = smul.addr %s929, 4
        %s931 = scalar_lea.vmem %s10, %s930
        %p933 = scmp.eq.s32.totalorder %s53, 0
        // Predicated region
        $region117: #{tpu_custom_call.1} parent=87 // pred_check
          %p934 = pneg %p933
        $region118: #{tpu_custom_call.1} parent=87 // pred_check_branch
          %936 = sbr.rel (%p934) target = $region120
        $region119: #{tpu_custom_call.1} parent=87 // pred_region
          %v937 = vld [vmem:[%s904] sm:$0xff]
          %vm938 = vcmask 261120
          %939 = vst.msk [vmem:[#allocation2] sm:$0xff] %vm938, %v937
        $region120: #{tpu_custom_call.1} parent=87 // pred_fallthru
          _
        %v940 = vld [vmem:[#allocation2] sm:$0xff]
        %v941 = vlaneseq
        %v942 = vshrl.u32 %v941, 7
        %v943 = vlaneseq
        %v944 = vand.u32 %v943, 127
        %vm945 = vcmp.gt.s32.totalorder %v944, %v942
        %v946 = vsel %vm945, -1e+09, 0.0
        %v947 = vpack.c.bf16 %v940, %v940
        %v948 = vld [vmem:[%s913] sm:$0xf]
        %v949 = vld [vmem:[%s913 + $0x4] sm:$0xf]
        %v950 = vld [vmem:[%s913 + $0x8] sm:$0xf]
        %v951 = vld [vmem:[%s913 + $0xc] sm:$0xf]
        %v952 = vld [vmem:[%s916] sm:$0x1]
        %v954 = vlaneseq
        %v955 = vshrl.u32 %v954, 7
        %v956 = vsub.s32 0, %v955
        %v957 = vrot.slane %v952, %v956
        %v963 = vunpack.c.l.b16 %v948
        %v964 = vunpack.c.l.b16 %v949
        %v965 = vunpack.c.l.b16 %v950
        %v966 = vunpack.c.l.b16 %v951
        %v967 = vpack.c.b16 %v964, %v963
        %v968 = vpack.c.b16 %v966, %v965
        %vm971 = vcmask 261120
        %v973 = vsel %vm971, %v947, 0
        %975 = vmatprep.subr.bf16.mxu0 0
        %976 = vmatpush1.bf16.msra.mxu0 %v967
        %977 = vmatprep.subr.bf16.mxu0 0
        %978 = vmatpush1.bf16.msra.mxu0 %v968
        %979 = vmatprep.subr.bf16.mxu0 0
        %980 = vmatpush1.bf16.msra.mxu0 0
        %981 = vmatprep.subr.bf16.mxu0 0
        %982 = vmatpush1.bf16.msra.mxu0 0
        %983 = vmatprep.subr.bf16.mxu0 0
        %984 = vmatpush1.bf16.msra.mxu0 0
        %985 = vmatprep.subr.bf16.mxu0 0
        %986 = vmatpush1.bf16.msra.mxu0 0
        %987 = vmatprep.subr.bf16.mxu0 0
        %988 = vmatpush1.bf16.msra.mxu0 0
        %989 = vmatprep.subr.bf16.mxu0 0
        %990 = vmatpush1.bf16.msra.mxu0 0
        %991 = vmatprep.subr.bf16.mxu0 0
        %992 = vmatpush1.bf16.msra.mxu0 0
        %993 = vmatprep.subr.bf16.mxu0 0
        %994 = vmatpush1.bf16.msra.mxu0 0
        %995 = vmatprep.subr.bf16.mxu0 0
        %996 = vmatpush1.bf16.msra.mxu0 0
        %997 = vmatprep.subr.bf16.mxu0 0
        %998 = vmatpush1.bf16.msra.mxu0 0
        %999 = vmatprep.subr.bf16.mxu0 0
        %1000 = vmatpush1.bf16.msra.mxu0 0
        %1001 = vmatprep.subr.bf16.mxu0 0
        %1002 = vmatpush1.bf16.msra.mxu0 0
        %1003 = vmatprep.subr.bf16.mxu0 0
        %1004 = vmatpush1.bf16.msra.mxu0 0
        %1005 = vmatprep.subr.bf16.mxu0 0
        %1006 = vmatpush1.bf16.msra.mxu0 0
        %1007 = vmatprep.mubr.bf16.mxu0 0
        %1008 = vmatmul.mubr.bf16.gmra.mrb[0].mxu0 %v973
        %v1009 = vpop.f32.mrb[0].mxu0
        %v1010 = vadd.f32 %v957, %v1009
        %v1011 = vpop.f32.mrb[0].mxu0
        %v1012 = vpop.f32.mrb[0].mxu0
        %v1013 = vpop.f32.mrb[0].mxu0
        %1014 = vdwg.mxu0
        %1016 = vrot.lane.b32.xlu0 %v1010, 104
        %v1017 = vpop.permute.xlu0 %1016
        %1019 = vrot.lane.b32.xlu0 %v1010, 80
        %v1020 = vpop.permute.xlu0 %1019
        %1022 = vrot.lane.b32.xlu0 %v1010, 56
        %v1023 = vpop.permute.xlu0 %1022
        %v1025 = vpack.c.bf16 %v1010, %v1010
        %v1026 = vpack.c.bf16 %v1017, %v1017
        %v1027 = vpack.c.bf16 %v1020, %v1020
        %v1028 = vpack.c.bf16 %v1023, %v1023
        %1030 = vrot.lane.b32.xlu0 %v1025, 120
        %v1031 = vpop.permute.xlu0 %1030
        %vm1032 = vcmask 64512
        %v1034 = vsel %vm1032, %v1025, 0
        %v1037 = vsel %vm1032, %v1031, 0
        %1039 = vmatprep.subr.bf16.mxu0 0
        %1040 = vmatpush1.bf16.xpose.msra.mxu0 %v1037
        %1041 = vmatprep.subr.bf16.mxu0 0
        %1042 = vmatpush1.bf16.xpose.msra.mxu0 0
        %1043 = vmatprep.subr.bf16.mxu0 0
        %1044 = vmatpush1.bf16.xpose.msra.mxu0 0
        %1045 = vmatprep.subr.bf16.mxu0 0
        %1046 = vmatpush1.bf16.xpose.msra.mxu0 0
        %1047 = vmatprep.subr.bf16.mxu0 0
        %1048 = vmatpush1.bf16.xpose.msra.mxu0 0
        %1049 = vmatprep.subr.bf16.mxu0 0
        %1050 = vmatpush1.bf16.xpose.msra.mxu0 0
        %1051 = vmatprep.subr.bf16.mxu0 0
        %1052 = vmatpush1.bf16.xpose.msra.mxu0 0
        %1053 = vmatprep.subr.bf16.mxu0 0
        %1054 = vmatpush1.bf16.xpose.msra.mxu0 0
        %1055 = vmatprep.subr.bf16.mxu0 0
        %1056 = vmatpush1.bf16.xpose.msra.mxu0 0
        %1057 = vmatprep.subr.bf16.mxu0 0
        %1058 = vmatpush1.bf16.xpose.msra.mxu0 0
        %1059 = vmatprep.subr.bf16.mxu0 0
        %1060 = vmatpush1.bf16.xpose.msra.mxu0 0
        %1061 = vmatprep.subr.bf16.mxu0 0
        %1062 = vmatpush1.bf16.xpose.msra.mxu0 0
        %1063 = vmatprep.subr.bf16.mxu0 0
        %1064 = vmatpush1.bf16.xpose.msra.mxu0 0
        %1065 = vmatprep.subr.bf16.mxu0 0
        %1066 = vmatpush1.bf16.xpose.msra.mxu0 0
        %1067 = vmatprep.subr.bf16.mxu0 0
        %1068 = vmatpush1.bf16.xpose.msra.mxu0 0
        %1069 = vmatprep.subr.bf16.mxu0 0
        %1070 = vmatpush1.bf16.xpose.msra.mxu0 0
        %1071 = vmatprep.mubr.bf16.mxu0 0
        %1072 = vmatmul.mubr.bf16.gmra.mrb[0].mxu0 %v1034
        %v1073 = vpop.f32.mrb[0].mxu0
        %v1074 = vadd.f32 0.0, %v1073
        %v1075 = vpop.f32.mrb[0].mxu0
        %v1076 = vpop.f32.mrb[0].mxu0
        %v1077 = vpop.f32.mrb[0].mxu0
        %1078 = vdwg.mxu0
        %1080 = vrot.lane.b32.xlu0 %v1026, 120
        %v1081 = vpop.permute.xlu0 %1080
        %v1083 = vsel %vm1032, %v1026, 0
        %v1086 = vsel %vm1032, %v1081, 0
        %1088 = vmatprep.subr.bf16.mxu0 0
        %1089 = vmatpush1.bf16.xpose.msra.mxu0 %v1086
        %1090 = vmatprep.subr.bf16.mxu0 0
        %1091 = vmatpush1.bf16.xpose.msra.mxu0 0
        %1092 = vmatprep.subr.bf16.mxu0 0
        %1093 = vmatpush1.bf16.xpose.msra.mxu0 0
        %1094 = vmatprep.subr.bf16.mxu0 0
        %1095 = vmatpush1.bf16.xpose.msra.mxu0 0
        %1096 = vmatprep.subr.bf16.mxu0 0
        %1097 = vmatpush1.bf16.xpose.msra.mxu0 0
        %1098 = vmatprep.subr.bf16.mxu0 0
        %1099 = vmatpush1.bf16.xpose.msra.mxu0 0
        %1100 = vmatprep.subr.bf16.mxu0 0
        %1101 = vmatpush1.bf16.xpose.msra.mxu0 0
        %1102 = vmatprep.subr.bf16.mxu0 0
        %1103 = vmatpush1.bf16.xpose.msra.mxu0 0
        %1104 = vmatprep.subr.bf16.mxu0 0
        %1105 = vmatpush1.bf16.xpose.msra.mxu0 0
        %1106 = vmatprep.subr.bf16.mxu0 0
        %1107 = vmatpush1.bf16.xpose.msra.mxu0 0
        %1108 = vmatprep.subr.bf16.mxu0 0
        %1109 = vmatpush1.bf16.xpose.msra.mxu0 0
        %1110 = vmatprep.subr.bf16.mxu0 0
        %1111 = vmatpush1.bf16.xpose.msra.mxu0 0
        %1112 = vmatprep.subr.bf16.mxu0 0
        %1113 = vmatpush1.bf16.xpose.msra.mxu0 0
        %1114 = vmatprep.subr.bf16.mxu0 0
        %1115 = vmatpush1.bf16.xpose.msra.mxu0 0
        %1116 = vmatprep.subr.bf16.mxu0 0
        %1117 = vmatpush1.bf16.xpose.msra.mxu0 0
        %1118 = vmatprep.subr.bf16.mxu0 0
        %1119 = vmatpush1.bf16.xpose.msra.mxu0 0
        %1120 = vmatprep.mubr.bf16.mxu0 0
        %1121 = vmatmul.mubr.bf16.gmra.mrb[0].mxu0 %v1083
        %v1122 = vpop.f32.mrb[0].mxu0
        %v1123 = vadd.f32 0.0, %v1122
        %v1124 = vpop.f32.mrb[0].mxu0
        %v1125 = vpop.f32.mrb[0].mxu0
        %v1126 = vpop.f32.mrb[0].mxu0
        %1127 = vdwg.mxu0
        %1129 = vrot.lane.b32.xlu0 %v1027, 120
        %v1130 = vpop.permute.xlu0 %1129
        %v1132 = vsel %vm1032, %v1027, 0
        %v1135 = vsel %vm1032, %v1130, 0
        %1137 = vmatprep.subr.bf16.mxu0 0
        %1138 = vmatpush1.bf16.xpose.msra.mxu0 %v1135
        %1139 = vmatprep.subr.bf16.mxu0 0
        %1140 = vmatpush1.bf16.xpose.msra.mxu0 0
        %1141 = vmatprep.subr.bf16.mxu0 0
        %1142 = vmatpush1.bf16.xpose.msra.mxu0 0
        %1143 = vmatprep.subr.bf16.mxu0 0
        %1144 = vmatpush1.bf16.xpose.msra.mxu0 0
        %1145 = vmatprep.subr.bf16.mxu0 0
        %1146 = vmatpush1.bf16.xpose.msra.mxu0 0
        %1147 = vmatprep.subr.bf16.mxu0 0
        %1148 = vmatpush1.bf16.xpose.msra.mxu0 0
        %1149 = vmatprep.subr.bf16.mxu0 0
        %1150 = vmatpush1.bf16.xpose.msra.mxu0 0
        %1151 = vmatprep.subr.bf16.mxu0 0
        %1152 = vmatpush1.bf16.xpose.msra.mxu0 0
        %1153 = vmatprep.subr.bf16.mxu0 0
        %1154 = vmatpush1.bf16.xpose.msra.mxu0 0
        %1155 = vmatprep.subr.bf16.mxu0 0
        %1156 = vmatpush1.bf16.xpose.msra.mxu0 0
        %1157 = vmatprep.subr.bf16.mxu0 0
        %1158 = vmatpush1.bf16.xpose.msra.mxu0 0
        %1159 = vmatprep.subr.bf16.mxu0 0
        %1160 = vmatpush1.bf16.xpose.msra.mxu0 0
        %1161 = vmatprep.subr.bf16.mxu0 0
        %1162 = vmatpush1.bf16.xpose.msra.mxu0 0
        %1163 = vmatprep.subr.bf16.mxu0 0
        %1164 = vmatpush1.bf16.xpose.msra.mxu0 0
        %1165 = vmatprep.subr.bf16.mxu0 0
        %1166 = vmatpush1.bf16.xpose.msra.mxu0 0
        %1167 = vmatprep.subr.bf16.mxu0 0
        %1168 = vmatpush1.bf16.xpose.msra.mxu0 0
        %1169 = vmatprep.mubr.bf16.mxu0 0
        %1170 = vmatmul.mubr.bf16.gmra.mrb[0].mxu0 %v1132
        %v1171 = vpop.f32.mrb[0].mxu0
        %v1172 = vadd.f32 0.0, %v1171
        %v1173 = vpop.f32.mrb[0].mxu0
        %v1174 = vpop.f32.mrb[0].mxu0
        %v1175 = vpop.f32.mrb[0].mxu0
        %1176 = vdwg.mxu0
        %1178 = vrot.lane.b32.xlu0 %v1028, 120
        %v1179 = vpop.permute.xlu0 %1178
        %v1181 = vsel %vm1032, %v1028, 0
        %v1184 = vsel %vm1032, %v1179, 0
        %1186 = vmatprep.subr.bf16.mxu0 0
        %1187 = vmatpush1.bf16.xpose.msra.mxu0 %v1184
        %1188 = vmatprep.subr.bf16.mxu0 0
        %1189 = vmatpush1.bf16.xpose.msra.mxu0 0
        %1190 = vmatprep.subr.bf16.mxu0 0
        %1191 = vmatpush1.bf16.xpose.msra.mxu0 0
        %1192 = vmatprep.subr.bf16.mxu0 0
        %1193 = vmatpush1.bf16.xpose.msra.mxu0 0
        %1194 = vmatprep.subr.bf16.mxu0 0
        %1195 = vmatpush1.bf16.xpose.msra.mxu0 0
        %1196 = vmatprep.subr.bf16.mxu0 0
        %1197 = vmatpush1.bf16.xpose.msra.mxu0 0
        %1198 = vmatprep.subr.bf16.mxu0 0
        %1199 = vmatpush1.bf16.xpose.msra.mxu0 0
        %1200 = vmatprep.subr.bf16.mxu0 0
        %1201 = vmatpush1.bf16.xpose.msra.mxu0 0
        %1202 = vmatprep.subr.bf16.mxu0 0
        %1203 = vmatpush1.bf16.xpose.msra.mxu0 0
        %1204 = vmatprep.subr.bf16.mxu0 0
        %1205 = vmatpush1.bf16.xpose.msra.mxu0 0
        %1206 = vmatprep.subr.bf16.mxu0 0
        %1207 = vmatpush1.bf16.xpose.msra.mxu0 0
        %1208 = vmatprep.subr.bf16.mxu0 0
        %1209 = vmatpush1.bf16.xpose.msra.mxu0 0
        %1210 = vmatprep.subr.bf16.mxu0 0
        %1211 = vmatpush1.bf16.xpose.msra.mxu0 0
        %1212 = vmatprep.subr.bf16.mxu0 0
        %1213 = vmatpush1.bf16.xpose.msra.mxu0 0
        %1214 = vmatprep.subr.bf16.mxu0 0
        %1215 = vmatpush1.bf16.xpose.msra.mxu0 0
        %1216 = vmatprep.subr.bf16.mxu0 0
        %1217 = vmatpush1.bf16.xpose.msra.mxu0 0
        %1218 = vmatprep.mubr.bf16.mxu0 0
        %1219 = vmatmul.mubr.bf16.gmra.mrb[0].mxu0 %v1181
        %v1220 = vpop.f32.mrb[0].mxu0
        %v1221 = vadd.f32 0.0, %v1220
        %v1222 = vpop.f32.mrb[0].mxu0
        %v1223 = vpop.f32.mrb[0].mxu0
        %v1224 = vpop.f32.mrb[0].mxu0
        %1225 = vdwg.mxu0
        %v1226 = vmul.f32 %v1074, 0.35355338
        %v1227 = vmul.f32 %v1123, 0.35355338
        %v1228 = vmul.f32 %v1172, 0.35355338
        %v1229 = vmul.f32 %v1221, 0.35355338
        %v1230 = vadd.f32 %v1226, %v946
        %v1231 = vadd.f32 %v1227, %v946
        %v1232 = vadd.f32 %v1228, %v946
        %v1233 = vadd.f32 %v1229, %v946
        %v1234 = vsel %vm1032, %v1230, -inf
        %1235 = vmax.xlane.f32.xlu0 %v1234
        %v1236 = vpop.xlane.xlu0 %1235
        %v1237 = vsel %vm1032, %v1231, -inf
        %1238 = vmax.xlane.f32.xlu0 %v1237
        %v1239 = vpop.xlane.xlu0 %1238
        %v1240 = vsel %vm1032, %v1232, -inf
        %1241 = vmax.xlane.f32.xlu0 %v1240
        %v1242 = vpop.xlane.xlu0 %1241
        %v1243 = vsel %vm1032, %v1233, -inf
        %1244 = vmax.xlane.f32.xlu0 %v1243
        %v1245 = vpop.xlane.xlu0 %1244
        %v1246 = vsub.f32 %v1230, %v1236
        %v1247 = vsub.f32 %v1231, %v1239
        %v1248 = vsub.f32 %v1232, %v1242
        %v1249 = vsub.f32 %v1233, %v1245
        %v1250 = vmul.f32 %v1246, 1.442695
        %v1251 = vpow.pop %v1250
        %v1252 = vmul.f32 %v1247, 1.442695
        %v1253 = vpow.pop %v1252
        %v1254 = vmul.f32 %v1248, 1.442695
        %v1255 = vpow.pop %v1254
        %v1256 = vmul.f32 %v1249, 1.442695
        %v1257 = vpow.pop %v1256
        %v1258 = vsel %vm1032, %v1251, 0.0
        %1259 = vadd.xlane.f32.xlu0 %v1258
        %v1260 = vpop.xlane.xlu0 %1259
        %v1261 = vsel %vm1032, %v1253, 0.0
        %1262 = vadd.xlane.f32.xlu0 %v1261
        %v1263 = vpop.xlane.xlu0 %1262
        %v1264 = vsel %vm1032, %v1255, 0.0
        %1265 = vadd.xlane.f32.xlu0 %v1264
        %v1266 = vpop.xlane.xlu0 %1265
        %v1267 = vsel %vm1032, %v1257, 0.0
        %1268 = vadd.xlane.f32.xlu0 %v1267
        %v1269 = vpop.xlane.xlu0 %1268
        %v1270 = vrcp.pop %v1260
        %v1271 = vrcp.pop %v1263
        %v1272 = vrcp.pop %v1266
        %v1273 = vrcp.pop %v1269
        %v1274 = vmul.f32 %v1251, %v1270
        %v1275 = vmul.f32 %v1253, %v1271
        %v1276 = vmul.f32 %v1255, %v1272
        %v1277 = vmul.f32 %v1257, %v1273
        %v1278 = vpack.c.bf16 %v1274, %v1274
        %v1279 = vpack.c.bf16 %v1275, %v1275
        %v1280 = vpack.c.bf16 %v1276, %v1276
        %v1281 = vpack.c.bf16 %v1277, %v1277
        %1282 = vrot.lane.b32.xlu0 %v1025, 112
        %v1283 = vpop.permute.xlu0 %1282
        %v1285 = vsel %vm1032, %v1278, 0
        %vm1287 = vcmask 1043456
        %v1289 = vsel %vm1287, %v1283, 0
        %1291 = vmatprep.subr.bf16.mxu0 0
        %1292 = vmatpush1.bf16.msra.mxu0 %v1289
        %1293 = vmatprep.subr.bf16.mxu0 0
        %1294 = vmatpush1.bf16.msra.mxu0 0
        %1295 = vmatprep.subr.bf16.mxu0 0
        %1296 = vmatpush1.bf16.msra.mxu0 0
        %1297 = vmatprep.subr.bf16.mxu0 0
        %1298 = vmatpush1.bf16.msra.mxu0 0
        %1299 = vmatprep.subr.bf16.mxu0 0
        %1300 = vmatpush1.bf16.msra.mxu0 0
        %1301 = vmatprep.subr.bf16.mxu0 0
        %1302 = vmatpush1.bf16.msra.mxu0 0
        %1303 = vmatprep.subr.bf16.mxu0 0
        %1304 = vmatpush1.bf16.msra.mxu0 0
        %1305 = vmatprep.subr.bf16.mxu0 0
        %1306 = vmatpush1.bf16.msra.mxu0 0
        %1307 = vmatprep.subr.bf16.mxu0 0
        %1308 = vmatpush1.bf16.msra.mxu0 0
        %1309 = vmatprep.subr.bf16.mxu0 0
        %1310 = vmatpush1.bf16.msra.mxu0 0
        %1311 = vmatprep.subr.bf16.mxu0 0
        %1312 = vmatpush1.bf16.msra.mxu0 0
        %1313 = vmatprep.subr.bf16.mxu0 0
        %1314 = vmatpush1.bf16.msra.mxu0 0
        %1315 = vmatprep.subr.bf16.mxu0 0
        %1316 = vmatpush1.bf16.msra.mxu0 0
        %1317 = vmatprep.subr.bf16.mxu0 0
        %1318 = vmatpush1.bf16.msra.mxu0 0
        %1319 = vmatprep.subr.bf16.mxu0 0
        %1320 = vmatpush1.bf16.msra.mxu0 0
        %1321 = vmatprep.subr.bf16.mxu0 0
        %1322 = vmatpush1.bf16.msra.mxu0 0
        %1323 = vmatprep.mubr.bf16.mxu0 0
        %1324 = vmatmul.mubr.bf16.gmra.mrb[0].mxu0 %v1285
        %v1325 = vpop.f32.mrb[0].mxu0
        %v1326 = vadd.f32 0.0, %v1325
        %v1327 = vpop.f32.mrb[0].mxu0
        %v1328 = vpop.f32.mrb[0].mxu0
        %v1329 = vpop.f32.mrb[0].mxu0
        %1330 = vdwg.mxu0
        %1331 = vrot.lane.b32.xlu0 %v1026, 112
        %v1332 = vpop.permute.xlu0 %1331
        %v1334 = vsel %vm1032, %v1279, 0
        %v1337 = vsel %vm1287, %v1332, 0
        %1339 = vmatprep.subr.bf16.mxu0 0
        %1340 = vmatpush1.bf16.msra.mxu0 %v1337
        %1341 = vmatprep.subr.bf16.mxu0 0
        %1342 = vmatpush1.bf16.msra.mxu0 0
        %1343 = vmatprep.subr.bf16.mxu0 0
        %1344 = vmatpush1.bf16.msra.mxu0 0
        %1345 = vmatprep.subr.bf16.mxu0 0
        %1346 = vmatpush1.bf16.msra.mxu0 0
        %1347 = vmatprep.subr.bf16.mxu0 0
        %1348 = vmatpush1.bf16.msra.mxu0 0
        %1349 = vmatprep.subr.bf16.mxu0 0
        %1350 = vmatpush1.bf16.msra.mxu0 0
        %1351 = vmatprep.subr.bf16.mxu0 0
        %1352 = vmatpush1.bf16.msra.mxu0 0
        %1353 = vmatprep.subr.bf16.mxu0 0
        %1354 = vmatpush1.bf16.msra.mxu0 0
        %1355 = vmatprep.subr.bf16.mxu0 0
        %1356 = vmatpush1.bf16.msra.mxu0 0
        %1357 = vmatprep.subr.bf16.mxu0 0
        %1358 = vmatpush1.bf16.msra.mxu0 0
        %1359 = vmatprep.subr.bf16.mxu0 0
        %1360 = vmatpush1.bf16.msra.mxu0 0
        %1361 = vmatprep.subr.bf16.mxu0 0
        %1362 = vmatpush1.bf16.msra.mxu0 0
        %1363 = vmatprep.subr.bf16.mxu0 0
        %1364 = vmatpush1.bf16.msra.mxu0 0
        %1365 = vmatprep.subr.bf16.mxu0 0
        %1366 = vmatpush1.bf16.msra.mxu0 0
        %1367 = vmatprep.subr.bf16.mxu0 0
        %1368 = vmatpush1.bf16.msra.mxu0 0
        %1369 = vmatprep.subr.bf16.mxu0 0
        %1370 = vmatpush1.bf16.msra.mxu0 0
        %1371 = vmatprep.mubr.bf16.mxu0 0
        %1372 = vmatmul.mubr.bf16.gmra.mrb[0].mxu0 %v1334
        %v1373 = vpop.f32.mrb[0].mxu0
        %v1374 = vadd.f32 0.0, %v1373
        %v1375 = vpop.f32.mrb[0].mxu0
        %v1376 = vpop.f32.mrb[0].mxu0
        %v1377 = vpop.f32.mrb[0].mxu0
        %1378 = vdwg.mxu0
        %1379 = vrot.lane.b32.xlu0 %v1027, 112
        %v1380 = vpop.permute.xlu0 %1379
        %v1382 = vsel %vm1032, %v1280, 0
        %v1385 = vsel %vm1287, %v1380, 0
        %1387 = vmatprep.subr.bf16.mxu0 0
        %1388 = vmatpush1.bf16.msra.mxu0 %v1385
        %1389 = vmatprep.subr.bf16.mxu0 0
        %1390 = vmatpush1.bf16.msra.mxu0 0
        %1391 = vmatprep.subr.bf16.mxu0 0
        %1392 = vmatpush1.bf16.msra.mxu0 0
        %1393 = vmatprep.subr.bf16.mxu0 0
        %1394 = vmatpush1.bf16.msra.mxu0 0
        %1395 = vmatprep.subr.bf16.mxu0 0
        %1396 = vmatpush1.bf16.msra.mxu0 0
        %1397 = vmatprep.subr.bf16.mxu0 0
        %1398 = vmatpush1.bf16.msra.mxu0 0
        %1399 = vmatprep.subr.bf16.mxu0 0
        %1400 = vmatpush1.bf16.msra.mxu0 0
        %1401 = vmatprep.subr.bf16.mxu0 0
        %1402 = vmatpush1.bf16.msra.mxu0 0
        %1403 = vmatprep.subr.bf16.mxu0 0
        %1404 = vmatpush1.bf16.msra.mxu0 0
        %1405 = vmatprep.subr.bf16.mxu0 0
        %1406 = vmatpush1.bf16.msra.mxu0 0
        %1407 = vmatprep.subr.bf16.mxu0 0
        %1408 = vmatpush1.bf16.msra.mxu0 0
        %1409 = vmatprep.subr.bf16.mxu0 0
        %1410 = vmatpush1.bf16.msra.mxu0 0
        %1411 = vmatprep.subr.bf16.mxu0 0
        %1412 = vmatpush1.bf16.msra.mxu0 0
        %1413 = vmatprep.subr.bf16.mxu0 0
        %1414 = vmatpush1.bf16.msra.mxu0 0
        %1415 = vmatprep.subr.bf16.mxu0 0
        %1416 = vmatpush1.bf16.msra.mxu0 0
        %1417 = vmatprep.subr.bf16.mxu0 0
        %1418 = vmatpush1.bf16.msra.mxu0 0
        %1419 = vmatprep.mubr.bf16.mxu0 0
        %1420 = vmatmul.mubr.bf16.gmra.mrb[0].mxu0 %v1382
        %v1421 = vpop.f32.mrb[0].mxu0
        %v1422 = vadd.f32 0.0, %v1421
        %v1423 = vpop.f32.mrb[0].mxu0
        %v1424 = vpop.f32.mrb[0].mxu0
        %v1425 = vpop.f32.mrb[0].mxu0
        %1426 = vdwg.mxu0
        %1427 = vrot.lane.b32.xlu0 %v1028, 112
        %v1428 = vpop.permute.xlu0 %1427
        %v1430 = vsel %vm1032, %v1281, 0
        %v1433 = vsel %vm1287, %v1428, 0
        %1435 = vmatprep.subr.bf16.mxu0 0
        %1436 = vmatpush1.bf16.msra.mxu0 %v1433
        %1437 = vmatprep.subr.bf16.mxu0 0
        %1438 = vmatpush1.bf16.msra.mxu0 0
        %1439 = vmatprep.subr.bf16.mxu0 0
        %1440 = vmatpush1.bf16.msra.mxu0 0
        %1441 = vmatprep.subr.bf16.mxu0 0
        %1442 = vmatpush1.bf16.msra.mxu0 0
        %1443 = vmatprep.subr.bf16.mxu0 0
        %1444 = vmatpush1.bf16.msra.mxu0 0
        %1445 = vmatprep.subr.bf16.mxu0 0
        %1446 = vmatpush1.bf16.msra.mxu0 0
        %1447 = vmatprep.subr.bf16.mxu0 0
        %1448 = vmatpush1.bf16.msra.mxu0 0
        %1449 = vmatprep.subr.bf16.mxu0 0
        %1450 = vmatpush1.bf16.msra.mxu0 0
        %1451 = vmatprep.subr.bf16.mxu0 0
        %1452 = vmatpush1.bf16.msra.mxu0 0
        %1453 = vmatprep.subr.bf16.mxu0 0
        %1454 = vmatpush1.bf16.msra.mxu0 0
        %1455 = vmatprep.subr.bf16.mxu0 0
        %1456 = vmatpush1.bf16.msra.mxu0 0
        %1457 = vmatprep.subr.bf16.mxu0 0
        %1458 = vmatpush1.bf16.msra.mxu0 0
        %1459 = vmatprep.subr.bf16.mxu0 0
        %1460 = vmatpush1.bf16.msra.mxu0 0
        %1461 = vmatprep.subr.bf16.mxu0 0
        %1462 = vmatpush1.bf16.msra.mxu0 0
        %1463 = vmatprep.subr.bf16.mxu0 0
        %1464 = vmatpush1.bf16.msra.mxu0 0
        %1465 = vmatprep.subr.bf16.mxu0 0
        %1466 = vmatpush1.bf16.msra.mxu0 0
        %1467 = vmatprep.mubr.bf16.mxu0 0
        %1468 = vmatmul.mubr.bf16.gmra.mrb[0].mxu0 %v1430
        %v1469 = vpop.f32.mrb[0].mxu0
        %v1470 = vadd.f32 0.0, %v1469
        %v1471 = vpop.f32.mrb[0].mxu0
        %v1472 = vpop.f32.mrb[0].mxu0
        %v1473 = vpop.f32.mrb[0].mxu0
        %1474 = vdwg.mxu0
        %1476 = vrot.lane.b32.xlu0 %v1374, 8
        %v1477 = vpop.permute.xlu0 %1476
        %1480 = vrot.lane.b32.xlu0 %v1422, 16
        %v1481 = vpop.permute.xlu0 %1480
        %1484 = vrot.lane.b32.xlu0 %v1470, 24
        %v1485 = vpop.permute.xlu0 %1484
        %v1487 = vsel %vm1032, %v1326, %v1477
        %vm1488 = vcmask 130048
        %v1489 = vsel %vm1488, %v1487, %v1481
        %vm1490 = vcmask 195584
        %v1491 = vsel %vm1490, %v1489, %v1485
        %v1492 = vpack.c.bf16 %v1491, %v1491
        %v1493 = vld [vmem:[%s921] sm:$0xf]
        %v1494 = vld [vmem:[%s921 + $0x4] sm:$0xf]
        %v1495 = vld [vmem:[%s921 + $0x8] sm:$0xf]
        %v1496 = vld [vmem:[%s921 + $0xc] sm:$0xf]
        %v1497 = vld [vmem:[%s743] sm:$0x1]
        %v1499 = vlaneseq
        %v1500 = vshrl.u32 %v1499, 7
        %v1501 = vsub.s32 0, %v1500
        %v1502 = vrot.slane %v1497, %v1501
        %v1508 = vunpack.c.l.b16 %v1493
        %v1509 = vunpack.c.l.b16 %v1494
        %v1510 = vunpack.c.l.b16 %v1495
        %v1511 = vunpack.c.l.b16 %v1496
        %v1512 = vpack.c.b16 %v1509, %v1508
        %v1513 = vpack.c.b16 %v1511, %v1510
        %v1517 = vsel %vm971, %v1492, 0
        %1519 = vmatprep.subr.bf16.mxu0 0
        %1520 = vmatpush1.bf16.msra.mxu0 %v1512
        %1521 = vmatprep.subr.bf16.mxu0 0
        %1522 = vmatpush1.bf16.msra.mxu0 %v1513
        %1523 = vmatprep.subr.bf16.mxu0 0
        %1524 = vmatpush1.bf16.msra.mxu0 0
        %1525 = vmatprep.subr.bf16.mxu0 0
        %1526 = vmatpush1.bf16.msra.mxu0 0
        %1527 = vmatprep.subr.bf16.mxu0 0
        %1528 = vmatpush1.bf16.msra.mxu0 0
        %1529 = vmatprep.subr.bf16.mxu0 0
        %1530 = vmatpush1.bf16.msra.mxu0 0
        %1531 = vmatprep.subr.bf16.mxu0 0
        %1532 = vmatpush1.bf16.msra.mxu0 0
        %1533 = vmatprep.subr.bf16.mxu0 0
        %1534 = vmatpush1.bf16.msra.mxu0 0
        %1535 = vmatprep.subr.bf16.mxu0 0
        %1536 = vmatpush1.bf16.msra.mxu0 0
        %1537 = vmatprep.subr.bf16.mxu0 0
        %1538 = vmatpush1.bf16.msra.mxu0 0
        %1539 = vmatprep.subr.bf16.mxu0 0
        %1540 = vmatpush1.bf16.msra.mxu0 0
        %1541 = vmatprep.subr.bf16.mxu0 0
        %1542 = vmatpush1.bf16.msra.mxu0 0
        %1543 = vmatprep.subr.bf16.mxu0 0
        %1544 = vmatpush1.bf16.msra.mxu0 0
        %1545 = vmatprep.subr.bf16.mxu0 0
        %1546 = vmatpush1.bf16.msra.mxu0 0
        %1547 = vmatprep.subr.bf16.mxu0 0
        %1548 = vmatpush1.bf16.msra.mxu0 0
        %1549 = vmatprep.subr.bf16.mxu0 0
        %1550 = vmatpush1.bf16.msra.mxu0 0
        %1551 = vmatprep.mubr.bf16.mxu0 0
        %1552 = vmatmul.mubr.bf16.gmra.mrb[0].mxu0 %v1517
        %v1553 = vpop.f32.mrb[0].mxu0
        %v1554 = vadd.f32 %v1502, %v1553
        %v1555 = vpop.f32.mrb[0].mxu0
        %v1556 = vpop.f32.mrb[0].mxu0
        %v1557 = vpop.f32.mrb[0].mxu0
        %1558 = vdwg.mxu0
        %v1559 = vadd.f32 %v940, %v1554
        %v1560 = vld [vmem:[%s751] sm:$0x1]
        %v1561 = vld [vmem:[%s759] sm:$0x1]
        %v1562 = vsel %vm971, %v1559, 0.0
        %1563 = vadd.xlane.f32.xlu0 %v1562
        %v1564 = vpop.xlane.xlu0 %1563
        %v1565 = vrcp.pop 32.0
        %v1566 = vmul.f32 %v1564, %v1565
        %v1567 = vsub.f32 %v1559, %v1566
        %v1568 = vmul.f32 %v1567, %v1567
        %v1569 = vsel %vm971, %v1568, 0.0
        %1570 = vadd.xlane.f32.xlu0 %v1569
        %v1571 = vpop.xlane.xlu0 %1570
        %v1572 = vmul.f32 %v1571, %v1565
        %v1573 = vadd.f32 %v1572, 1e-05
        %v1574 = vrsqrt.pop %v1573
        %v1575 = vmul.f32 %v1567, %v1574
        %v1577 = vlaneseq
        %v1578 = vshrl.u32 %v1577, 7
        %v1579 = vsub.s32 0, %v1578
        %v1580 = vrot.slane %v1560, %v1579
        %v1582 = vmul.f32 %v1575, %v1580
        %v1584 = vlaneseq
        %v1585 = vshrl.u32 %v1584, 7
        %v1586 = vsub.s32 0, %v1585
        %v1587 = vrot.slane %v1561, %v1586
        %v1589 = vadd.f32 %v1582, %v1587
        %v1590 = vpack.c.bf16 %v1589, %v1589
        %v1591 = vld [vmem:[%s926] sm:$0xf]
        %v1592 = vld [vmem:[%s926 + $0x4] sm:$0xf]
        %v1593 = vld [vmem:[%s926 + $0x8] sm:$0xf]
        %v1594 = vld [vmem:[%s926 + $0xc] sm:$0xf]
        %v1595 = vld [vmem:[%s767] sm:$0x1]
        %v1597 = vlaneseq
        %v1598 = vshrl.u32 %v1597, 7
        %v1599 = vsub.s32 0, %v1598
        %v1600 = vrot.slane %v1595, %v1599
        %v1606 = vunpack.c.l.b16 %v1591
        %v1607 = vunpack.c.l.b16 %v1592
        %v1608 = vunpack.c.l.b16 %v1593
        %v1609 = vunpack.c.l.b16 %v1594
        %v1610 = vpack.c.b16 %v1607, %v1606
        %v1611 = vpack.c.b16 %v1609, %v1608
        %v1615 = vsel %vm971, %v1590, 0
        %1617 = vmatprep.subr.bf16.mxu0 0
        %1618 = vmatpush1.bf16.msra.mxu0 %v1610
        %1619 = vmatprep.subr.bf16.mxu0 0
        %1620 = vmatpush1.bf16.msra.mxu0 %v1611
        %1621 = vmatprep.subr.bf16.mxu0 0
        %1622 = vmatpush1.bf16.msra.mxu0 0
        %1623 = vmatprep.subr.bf16.mxu0 0
        %1624 = vmatpush1.bf16.msra.mxu0 0
        %1625 = vmatprep.subr.bf16.mxu0 0
        %1626 = vmatpush1.bf16.msra.mxu0 0
        %1627 = vmatprep.subr.bf16.mxu0 0
        %1628 = vmatpush1.bf16.msra.mxu0 0
        %1629 = vmatprep.subr.bf16.mxu0 0
        %1630 = vmatpush1.bf16.msra.mxu0 0
        %1631 = vmatprep.subr.bf16.mxu0 0
        %1632 = vmatpush1.bf16.msra.mxu0 0
        %1633 = vmatprep.subr.bf16.mxu0 0
        %1634 = vmatpush1.bf16.msra.mxu0 0
        %1635 = vmatprep.subr.bf16.mxu0 0
        %1636 = vmatpush1.bf16.msra.mxu0 0
        %1637 = vmatprep.subr.bf16.mxu0 0
        %1638 = vmatpush1.bf16.msra.mxu0 0
        %1639 = vmatprep.subr.bf16.mxu0 0
        %1640 = vmatpush1.bf16.msra.mxu0 0
        %1641 = vmatprep.subr.bf16.mxu0 0
        %1642 = vmatpush1.bf16.msra.mxu0 0
        %1643 = vmatprep.subr.bf16.mxu0 0
        %1644 = vmatpush1.bf16.msra.mxu0 0
        %1645 = vmatprep.subr.bf16.mxu0 0
        %1646 = vmatpush1.bf16.msra.mxu0 0
        %1647 = vmatprep.subr.bf16.mxu0 0
        %1648 = vmatpush1.bf16.msra.mxu0 0
        %1649 = vmatprep.mubr.bf16.mxu0 0
        %1650 = vmatmul.mubr.bf16.gmra.mrb[0].mxu0 %v1615
        %v1651 = vpop.f32.mrb[0].mxu0
        %v1652 = vadd.f32 %v1600, %v1651
        %v1653 = vpop.f32.mrb[0].mxu0
        %v1654 = vpop.f32.mrb[0].mxu0
        %v1655 = vpop.f32.mrb[0].mxu0
        %1656 = vdwg.mxu0
        %v1657 = vmax.f32 %v1652, 0.0
        %v1658 = vpack.c.bf16 %v1657, %v1657
        %v1659 = vld [vmem:[%s931] sm:$0xf]
        %v1660 = vld [vmem:[%s931 + $0x4] sm:$0xf]
        %v1661 = vld [vmem:[%s931 + $0x8] sm:$0xf]
        %v1662 = vld [vmem:[%s931 + $0xc] sm:$0xf]
        %v1663 = vld [vmem:[%s931 + $0x10] sm:$0xf]
        %v1664 = vld [vmem:[%s931 + $0x14] sm:$0xf]
        %v1665 = vld [vmem:[%s931 + $0x18] sm:$0xf]
        %v1666 = vld [vmem:[%s931 + $0x1c] sm:$0xf]
        %v1667 = vld [vmem:[%s931 + $0x20] sm:$0xf]
        %v1668 = vld [vmem:[%s931 + $0x24] sm:$0xf]
        %v1669 = vld [vmem:[%s931 + $0x28] sm:$0xf]
        %v1670 = vld [vmem:[%s931 + $0x2c] sm:$0xf]
        %v1671 = vld [vmem:[%s931 + $0x30] sm:$0xf]
        %v1672 = vld [vmem:[%s931 + $0x34] sm:$0xf]
        %v1673 = vld [vmem:[%s931 + $0x38] sm:$0xf]
        %v1674 = vld [vmem:[%s931 + $0x3c] sm:$0xf]
        %v1675 = vld [vmem:[%s775] sm:$0x1]
        %v1677 = vlaneseq
        %v1678 = vshrl.u32 %v1677, 7
        %v1679 = vsub.s32 0, %v1678
        %v1680 = vrot.slane %v1675, %v1679
        %v1698 = vunpack.c.l.b16 %v1659
        %v1699 = vunpack.c.l.b16 %v1660
        %v1700 = vunpack.c.l.b16 %v1661
        %v1701 = vunpack.c.l.b16 %v1662
        %v1702 = vunpack.c.l.b16 %v1663
        %v1703 = vunpack.c.l.b16 %v1664
        %v1704 = vunpack.c.l.b16 %v1665
        %v1705 = vunpack.c.l.b16 %v1666
        %v1706 = vunpack.c.l.b16 %v1667
        %v1707 = vunpack.c.l.b16 %v1668
        %v1708 = vunpack.c.l.b16 %v1669
        %v1709 = vunpack.c.l.b16 %v1670
        %v1710 = vunpack.c.l.b16 %v1671
        %v1711 = vunpack.c.l.b16 %v1672
        %v1712 = vunpack.c.l.b16 %v1673
        %v1713 = vunpack.c.l.b16 %v1674
        %v1714 = vpack.c.b16 %v1699, %v1698
        %v1715 = vpack.c.b16 %v1701, %v1700
        %v1716 = vpack.c.b16 %v1703, %v1702
        %v1717 = vpack.c.b16 %v1705, %v1704
        %v1718 = vpack.c.b16 %v1707, %v1706
        %v1719 = vpack.c.b16 %v1709, %v1708
        %v1720 = vpack.c.b16 %v1711, %v1710
        %v1721 = vpack.c.b16 %v1713, %v1712
        %1730 = vmatprep.subr.bf16.mxu0 0
        %1731 = vmatpush1.bf16.msra.mxu0 %v1714
        %1732 = vmatprep.subr.bf16.mxu0 0
        %1733 = vmatpush1.bf16.msra.mxu0 %v1715
        %1734 = vmatprep.subr.bf16.mxu0 0
        %1735 = vmatpush1.bf16.msra.mxu0 %v1716
        %1736 = vmatprep.subr.bf16.mxu0 0
        %1737 = vmatpush1.bf16.msra.mxu0 %v1717
        %1738 = vmatprep.subr.bf16.mxu0 0
        %1739 = vmatpush1.bf16.msra.mxu0 %v1718
        %1740 = vmatprep.subr.bf16.mxu0 0
        %1741 = vmatpush1.bf16.msra.mxu0 %v1719
        %1742 = vmatprep.subr.bf16.mxu0 0
        %1743 = vmatpush1.bf16.msra.mxu0 %v1720
        %1744 = vmatprep.subr.bf16.mxu0 0
        %1745 = vmatpush1.bf16.msra.mxu0 %v1721
        %1746 = vmatprep.subr.bf16.mxu0 0
        %1747 = vmatpush1.bf16.msra.mxu0 0
        %1748 = vmatprep.subr.bf16.mxu0 0
        %1749 = vmatpush1.bf16.msra.mxu0 0
        %1750 = vmatprep.subr.bf16.mxu0 0
        %1751 = vmatpush1.bf16.msra.mxu0 0
        %1752 = vmatprep.subr.bf16.mxu0 0
        %1753 = vmatpush1.bf16.msra.mxu0 0
        %1754 = vmatprep.subr.bf16.mxu0 0
        %1755 = vmatpush1.bf16.msra.mxu0 0
        %1756 = vmatprep.subr.bf16.mxu0 0
        %1757 = vmatpush1.bf16.msra.mxu0 0
        %1758 = vmatprep.subr.bf16.mxu0 0
        %1759 = vmatpush1.bf16.msra.mxu0 0
        %1760 = vmatprep.subr.bf16.mxu0 0
        %1761 = vmatpush1.bf16.msra.mxu0 0
        %1762 = vmatprep.mubr.bf16.mxu0 0
        %1763 = vmatmul.mubr.bf16.gmra.mrb[0].mxu0 %v1658
        %v1764 = vpop.f32.mrb[0].mxu0
        %v1765 = vadd.f32 %v1680, %v1764
        %v1766 = vpop.f32.mrb[0].mxu0
        %v1767 = vpop.f32.mrb[0].mxu0
        %v1768 = vpop.f32.mrb[0].mxu0
        %1769 = vdwg.mxu0
        %v1770 = vadd.f32 %v1589, %v1765
        %v1771 = vld [vmem:[%s783] sm:$0x1]
        %v1772 = vld [vmem:[%s791] sm:$0x1]
        %v1773 = vsel %vm971, %v1770, 0.0
        %1774 = vadd.xlane.f32.xlu0 %v1773
        %v1775 = vpop.xlane.xlu0 %1774
        %v1776 = vmul.f32 %v1775, %v1565
        %v1777 = vsub.f32 %v1770, %v1776
        %v1778 = vmul.f32 %v1777, %v1777
        %v1779 = vsel %vm971, %v1778, 0.0
        %1780 = vadd.xlane.f32.xlu0 %v1779
        %v1781 = vpop.xlane.xlu0 %1780
        %v1782 = vmul.f32 %v1781, %v1565
        %v1783 = vadd.f32 %v1782, 1e-05
        %v1784 = vrsqrt.pop %v1783
        %v1785 = vmul.f32 %v1777, %v1784
        %v1787 = vlaneseq
        %v1788 = vshrl.u32 %v1787, 7
        %v1789 = vsub.s32 0, %v1788
        %v1790 = vrot.slane %v1771, %v1789
        %v1792 = vmul.f32 %v1785, %v1790
        %v1794 = vlaneseq
        %v1795 = vshrl.u32 %v1794, 7
        %v1796 = vsub.s32 0, %v1795
        %v1797 = vrot.slane %v1772, %v1796
        %v1799 = vadd.f32 %v1792, %v1797
        %1800 = vst.msk [vmem:[#allocation2] sm:$0xff] %vm971, %v1799
        %p1801 = scmp.eq.s32.totalorder %s53, 1
        // Predicated region
        $region121: #{tpu_custom_call.1} parent=87 // pred_check
          %p1802 = pneg %p1801
        $region122: #{tpu_custom_call.1} parent=87 // pred_check_branch
          %1804 = sbr.rel (%p1802) target = $region124
        $region123: #{tpu_custom_call.1} parent=87 // pred_region
          %v1805 = vpack.c.bf16 %v1799, %v1799
          %v1806 = vld [vmem:[%s14] sm:$0xf]
          %v1807 = vld [vmem:[%s14 + $0x4] sm:$0xf]
          %v1808 = vld [vmem:[%s14 + $0x8] sm:$0xf]
          %v1809 = vld [vmem:[%s14 + $0xc] sm:$0xf]
          %v1814 = vunpack.c.l.b16 %v1806
          %v1815 = vunpack.c.l.b16 %v1807
          %v1816 = vunpack.c.l.b16 %v1808
          %v1817 = vunpack.c.l.b16 %v1809
          %v1818 = vpack.c.b16 %v1815, %v1814
          %v1819 = vpack.c.b16 %v1817, %v1816
          %v1823 = vsel %vm971, %v1805, 0
          %1825 = vmatprep.subr.bf16.mxu0 0
          %1826 = vmatpush1.bf16.msra.mxu0 %v1818
          %1827 = vmatprep.subr.bf16.mxu0 0
          %1828 = vmatpush1.bf16.msra.mxu0 %v1819
          %1829 = vmatprep.subr.bf16.mxu0 0
          %1830 = vmatpush1.bf16.msra.mxu0 0
          %1831 = vmatprep.subr.bf16.mxu0 0
          %1832 = vmatpush1.bf16.msra.mxu0 0
          %1833 = vmatprep.subr.bf16.mxu0 0
          %1834 = vmatpush1.bf16.msra.mxu0 0
          %1835 = vmatprep.subr.bf16.mxu0 0
          %1836 = vmatpush1.bf16.msra.mxu0 0
          %1837 = vmatprep.subr.bf16.mxu0 0
          %1838 = vmatpush1.bf16.msra.mxu0 0
          %1839 = vmatprep.subr.bf16.mxu0 0
          %1840 = vmatpush1.bf16.msra.mxu0 0
          %1841 = vmatprep.subr.bf16.mxu0 0
          %1842 = vmatpush1.bf16.msra.mxu0 0
          %1843 = vmatprep.subr.bf16.mxu0 0
          %1844 = vmatpush1.bf16.msra.mxu0 0
          %1845 = vmatprep.subr.bf16.mxu0 0
          %1846 = vmatpush1.bf16.msra.mxu0 0
          %1847 = vmatprep.subr.bf16.mxu0 0
          %1848 = vmatpush1.bf16.msra.mxu0 0
          %1849 = vmatprep.subr.bf16.mxu0 0
          %1850 = vmatpush1.bf16.msra.mxu0 0
          %1851 = vmatprep.subr.bf16.mxu0 0
          %1852 = vmatpush1.bf16.msra.mxu0 0
          %1853 = vmatprep.subr.bf16.mxu0 0
          %1854 = vmatpush1.bf16.msra.mxu0 0
          %1855 = vmatprep.subr.bf16.mxu0 0
          %1856 = vmatpush1.bf16.msra.mxu0 0
          %1857 = vmatprep.mubr.bf16.mxu0 0
          %1858 = vmatmul.mubr.bf16.gmra.mrb[0].mxu0 %v1823
          %v1859 = vpop.f32.mrb[0].mxu0
          %v1860 = vadd.f32 0.0, %v1859
          %v1861 = vpop.f32.mrb[0].mxu0
          %v1862 = vpop.f32.mrb[0].mxu0
          %v1863 = vpop.f32.mrb[0].mxu0
          %1864 = vdwg.mxu0
          %v1865 = vld [vmem:[%s908] sm:$0xff]
          %1867 = vset.pattern.permute.xlu0 0
          %1868 = vperm.xlu0 %1867, %v1865
          %v1869 = vpop.permute.xlu0 %1868
          %v1871 = vmul.f32 %v1860, %v1869
          %v1872 = vrot.slane %v1871, 4
          %v1873 = vadd.f32 %v1871, %v1872
          %v1874 = vrot.slane %v1873, 2
          %v1875 = vadd.f32 %v1873, %v1874
          %v1876 = vrot.slane %v1875, 1
          %v1877 = vadd.f32 %v1875, %v1876
          %v1878 = vmul.f32 %v1877, 0.125
          %1879 = vst [vmem:[%s900] sm:$0x1] %v1878
          %v1880 = vpack.c.bf16 %v1878, %v1878
          %v1881 = vld [vmem:[%s15] sm:$0xf]
          %v1882 = vld [vmem:[%s15 + $0x4] sm:$0xf]
          %v1883 = vld [vmem:[%s15 + $0x8] sm:$0xf]
          %v1884 = vld [vmem:[%s15 + $0xc] sm:$0xf]
          %v1885 = vld [vmem:[%s15 + $0x10] sm:$0xf]
          %v1886 = vld [vmem:[%s15 + $0x14] sm:$0xf]
          %v1887 = vld [vmem:[%s15 + $0x18] sm:$0xf]
          %v1888 = vld [vmem:[%s15 + $0x1c] sm:$0xf]
          %v1889 = vld [vmem:[%s15 + $0x20] sm:$0xf]
          %v1890 = vld [vmem:[%s15 + $0x24] sm:$0xf]
          %v1891 = vld [vmem:[%s15 + $0x28] sm:$0xf]
          %v1892 = vld [vmem:[%s15 + $0x2c] sm:$0xf]
          %v1893 = vld [vmem:[%s15 + $0x30] sm:$0xf]
          %v1894 = vld [vmem:[%s15 + $0x34] sm:$0xf]
          %v1895 = vld [vmem:[%s15 + $0x38] sm:$0xf]
          %v1896 = vld [vmem:[%s15 + $0x3c] sm:$0xf]
          %v1897 = vld [vmem:[%s16] sm:$0x1]
          %v1914 = vunpack.c.l.b16 %v1881
          %v1915 = vunpack.c.l.b16 %v1882
          %v1916 = vunpack.c.l.b16 %v1883
          %v1917 = vunpack.c.l.b16 %v1884
          %v1918 = vunpack.c.l.b16 %v1885
          %v1919 = vunpack.c.l.b16 %v1886
          %v1920 = vunpack.c.l.b16 %v1887
          %v1921 = vunpack.c.l.b16 %v1888
          %v1922 = vunpack.c.l.b16 %v1889
          %v1923 = vunpack.c.l.b16 %v1890
          %v1924 = vunpack.c.l.b16 %v1891
          %v1925 = vunpack.c.l.b16 %v1892
          %v1926 = vunpack.c.l.b16 %v1893
          %v1927 = vunpack.c.l.b16 %v1894
          %v1928 = vunpack.c.l.b16 %v1895
          %v1929 = vunpack.c.l.b16 %v1896
          %v1930 = vpack.c.b16 %v1915, %v1914
          %v1931 = vpack.c.b16 %v1917, %v1916
          %v1932 = vpack.c.b16 %v1919, %v1918
          %v1933 = vpack.c.b16 %v1921, %v1920
          %v1934 = vpack.c.b16 %v1923, %v1922
          %v1935 = vpack.c.b16 %v1925, %v1924
          %v1936 = vpack.c.b16 %v1927, %v1926
          %v1937 = vpack.c.b16 %v1929, %v1928
          %1946 = vmatprep.subr.bf16.mxu0 0
          %1947 = vmatpush1.bf16.msra.mxu0 %v1930
          %1948 = vmatprep.subr.bf16.mxu0 0
          %1949 = vmatpush1.bf16.msra.mxu0 %v1931
          %1950 = vmatprep.subr.bf16.mxu0 0
          %1951 = vmatpush1.bf16.msra.mxu0 %v1932
          %1952 = vmatprep.subr.bf16.mxu0 0
          %1953 = vmatpush1.bf16.msra.mxu0 %v1933
          %1954 = vmatprep.subr.bf16.mxu0 0
          %1955 = vmatpush1.bf16.msra.mxu0 %v1934
          %1956 = vmatprep.subr.bf16.mxu0 0
          %1957 = vmatpush1.bf16.msra.mxu0 %v1935
          %1958 = vmatprep.subr.bf16.mxu0 0
          %1959 = vmatpush1.bf16.msra.mxu0 %v1936
          %1960 = vmatprep.subr.bf16.mxu0 0
          %1961 = vmatpush1.bf16.msra.mxu0 %v1937
          %1962 = vmatprep.subr.bf16.mxu0 0
          %1963 = vmatpush1.bf16.msra.mxu0 0
          %1964 = vmatprep.subr.bf16.mxu0 0
          %1965 = vmatpush1.bf16.msra.mxu0 0
          %1966 = vmatprep.subr.bf16.mxu0 0
          %1967 = vmatpush1.bf16.msra.mxu0 0
          %1968 = vmatprep.subr.bf16.mxu0 0
          %1969 = vmatpush1.bf16.msra.mxu0 0
          %1970 = vmatprep.subr.bf16.mxu0 0
          %1971 = vmatpush1.bf16.msra.mxu0 0
          %1972 = vmatprep.subr.bf16.mxu0 0
          %1973 = vmatpush1.bf16.msra.mxu0 0
          %1974 = vmatprep.subr.bf16.mxu0 0
          %1975 = vmatpush1.bf16.msra.mxu0 0
          %1976 = vmatprep.subr.bf16.mxu0 0
          %1977 = vmatpush1.bf16.msra.mxu0 0
          %1978 = vmatprep.mubr.bf16.mxu0 0
          %1979 = vmatmul.mubr.bf16.gmra.mrb[0].mxu0 %v1880
          %v1980 = vpop.f32.mrb[0].mxu0
          %v1981 = vadd.f32 %v1897, %v1980
          %v1982 = vpop.f32.mrb[0].mxu0
          %v1983 = vpop.f32.mrb[0].mxu0
          %v1984 = vpop.f32.mrb[0].mxu0
          %1985 = vdwg.mxu0
          %1986 = vst [vmem:[%s894] sm:$0x1] %v1981
        $region124: #{tpu_custom_call.1} parent=87 // pred_fallthru
          _
        %s1987 = sand.u32 %s495, 1
        %s1988 = scalar_lea.sflag [#allocation5], %s1987
        %s1989 = sand.u32 %s495, 1
        %s1990 = scalar_lea.vmem [#allocation15], %s1989
        %s1991 = sand.u32 %s521, 1
        %s1992 = scalar_lea.sflag [#allocation17], %s1991
        %s1993 = sand.u32 %s521, 1
        %s1994 = scalar_lea.vmem [#allocation16], %s1993
        // Predicated region
        $region125: #{tpu_custom_call.1} parent=87 // pred_check
          %p1995 = pneg %p505
        $region126: #{tpu_custom_call.1} parent=87 // pred_check_branch
          %1997 = sbr.rel (%p1995) target = $region128
        $region127: #{tpu_custom_call.1} parent=87 // pred_region
          %s1999 = ssub.s32 16, 16
          %2000 = vsyncadd %s1988, %s1999
          %s2001 = smul.addr %s52, 16
          %s2002 = scalar_lea.hbm %s17, %s2001
          %s2004 = sshll.u32 %s1990, 4
          %s2005 = int_to_ptr.vmem [resolvable:$true] %s2004
          %2007 = dma.vmem_to_hbm [thread:$0]  %s2005, 16, %s2002, %s1988
        $region128: #{tpu_custom_call.1} parent=87 // pred_fallthru
          _
        // Predicated region
        $region129: #{tpu_custom_call.1} parent=87 // pred_check
          %p2008 = pneg %p531
        $region130: #{tpu_custom_call.1} parent=87 // pred_check_branch
          %2010 = sbr.rel (%p2008) target = $region132
        $region131: #{tpu_custom_call.1} parent=87 // pred_region
          %s2012 = ssub.s32 16, 16
          %2013 = vsyncadd %s1992, %s2012
          %s2014 = smul.addr %s52, 16
          %s2015 = scalar_lea.hbm %s18, %s2014
          %s2017 = sshll.u32 %s1994, 4
          %s2018 = int_to_ptr.vmem [resolvable:$true] %s2017
          %2020 = dma.vmem_to_hbm [thread:$0]  %s2018, 16, %s2015, %s1992
        $region132: #{tpu_custom_call.1} parent=87 // pred_fallthru
          _
      $region88: #{tpu_custom_call.1} parent=5 // pred_fallthru
        _
      %p2021 = scmp.le.s32.totalorder 2, %s43
      // Predicated region
      $region133: #{tpu_custom_call.1} parent=5 // pred_check
        %p2022 = pneg %p2021
      $region134: #{tpu_custom_call.1} parent=5 // pred_check_branch
        %2024 = sbr.rel (%p2022) target = $region136
      $region135: #{tpu_custom_call.1} parent=5 // pred_region
        %s2025 = ssub.s32 %s43, 2
        // Predicated region
        $region137: #{tpu_custom_call.1} parent=135 // pred_check
          %p2026 = pneg %p511
        $region138: #{tpu_custom_call.1} parent=135 // pred_check_branch
          %2028 = sbr.rel (%p2026) target = $region140
        $region139: #{tpu_custom_call.1} parent=135 // pred_region
          %s2029 = sand.u32 %s496, 1
          %s2030 = scalar_lea.sflag [#allocation5], %s2029
          %s2031 = sand.u32 %s496, 1
          %s2032 = scalar_lea.vmem [#allocation15], %s2031
          %2033 = dma.done %s2030, 16
        $region140: #{tpu_custom_call.1} parent=135 // pred_fallthru
          _
        // Predicated region
        $region141: #{tpu_custom_call.1} parent=135 // pred_check
          %p2034 = pneg %p537
        $region142: #{tpu_custom_call.1} parent=135 // pred_check_branch
          %2036 = sbr.rel (%p2034) target = $region144
        $region143: #{tpu_custom_call.1} parent=135 // pred_region
          %s2037 = sand.u32 %s522, 1
          %s2038 = scalar_lea.sflag [#allocation17], %s2037
          %s2039 = sand.u32 %s522, 1
          %s2040 = scalar_lea.vmem [#allocation16], %s2039
          %2041 = dma.done %s2038, 16
        $region144: #{tpu_custom_call.1} parent=135 // pred_fallthru
          _
      $region136: #{tpu_custom_call.1} parent=5 // pred_fallthru
        _
    $region6: #{tpu_custom_call.1} parent=1 // loop_footer
      %s47 = sadd.s32 1, %s43
    $region7: #{tpu_custom_call.1} parent=1 // loop_footer_branch
      %42 = sbr.rel target = $region3
    $region8: #{tpu_custom_call.1} parent=1 // loop_exit
      _
    %2042 = vsyncpa [#allocation4], 1
    %s2043 = scalar_lea.sflag [#allocation4], 1
    %2044 = vsyncpa %s2043, 1
    %2045 = vsyncpa [#allocation7], 1
    %s2046 = scalar_lea.sflag [#allocation7], 1
    %2047 = vsyncpa %s2046, 1
    %2048 = vsyncpa [#allocation10], 1
    %s2049 = scalar_lea.sflag [#allocation10], 1
    %2050 = vsyncpa %s2049, 1
    %2051 = vsyncpa [#allocation13], 1
    %s2052 = scalar_lea.sflag [#allocation13], 1
    %2053 = vsyncpa %s2052, 1
    %2054 = vsyncpa [#allocation5], 1
    %s2055 = scalar_lea.sflag [#allocation5], 1
    %2056 = vsyncpa %s2055, 1
    %2057 = vsyncpa [#allocation17], 1
    %s2058 = scalar_lea.sflag [#allocation17], 1
    %2059 = vsyncpa %s2058, 1

</llo_original>
